<compile_context>
chip_gen: v5e
topology: v5e:2x2
jax: 0.10.0
libtpu: 0.0.40
codegen_flags: <defaults>
</compile_context>

<pallas_src>
import functools

import jax
import jax.numpy as jnp
from jax.experimental import pallas as pl
from jax.experimental.pallas import tpu as pltpu


def _round_up(n, m):
    return ((n + m - 1) // m) * m


def _silu(v):
    # SiLU with EUP-only transcendentals: exp and the approximate reciprocal go
    # to the EUP slot; only the add/mul stay on the (binding) vector ALU.
    return v * pl.reciprocal(1.0 + jnp.exp(-v), approx=True)


def _mv2_kernel(x_ref, w1_ref, b1_ref, wd_ref, b2_ref, w2_ref, b3_ref,
                o_ref, hs_ref, *, tb, H, W, K, padding, skip_con):
    """One grid step = `tb` images of the full MV2 inverted-residual forward."""
    Cin = x_ref.shape[-1]
    hidden = w1_ref.shape[-1]
    Cout = w2_ref.shape[-1]
    p = padding
    Hp, Wp = hs_ref.shape[1], hs_ref.shape[2]
    Ho = H + 2 * p - K + 1            # stride == 1 only (see wrapper)
    Wo = W + 2 * p - K + 1
    Wacc = _round_up(Wo, 8)           # sublane-aligned compute width

    # ---- 1) pointwise expansion (MXU; BN1 scale folded into w1) + SiLU ------
    x2 = x_ref[...].reshape(tb * H * W, Cin)           # leading-dim merge: free
    h = jnp.dot(x2, w1_ref[...], preferred_element_type=jnp.float32)
    h = _silu(h + b1_ref[0])

    # ---- 2) stage hidden activation into a zero-bordered VMEM scratch -------
    # Rows carry the top/bottom padding (leading dim -> any offset is free).
    # Columns keep the data at offset 0 with zeros on the right; the rolls in
    # step 3 wrap left-padding reads into that zero region, so no misaligned
    # sublane stores / concatenations are ever materialized.
    if p > 0:
        zrow = jnp.zeros((tb, p, Wp, hidden), jnp.float32)
        hs_ref[:, 0:p, :, :] = zrow
        hs_ref[:, Hp - p:Hp, :, :] = zrow
        hs_ref[:, :, W:Wp, :] = jnp.zeros((tb, Hp, Wp - W, hidden), jnp.float32)
    hs_ref[:, p:p + H, 0:W, :] = h.reshape(tb, H, W, hidden)   # W % 8 == 0: free

    # ---- 3) depthwise KxK conv: K sublane rolls (XLU) + K*K FMAs (VPU) ------
    hsv = hs_ref[...]                                  # (tb, Hp, Wp, hidden)
    wd = wd_ref[...]                                   # (K*K, hidden); BN2 scale folded
    acc = None
    for j in range(K):                                 # static, tiny loops
        shift = (p - j) % Wp                           # shifted[wo] = hsv[wo + j - p]
        rolled = pltpu.roll(hsv, shift, axis=2) if shift else hsv
        for i in range(K):
            win = rolled[:, i:i + Ho, 0:Wacc, :]       # leading-dim + aligned slices
            contrib = win * wd[i * K + j]
            acc = contrib if acc is None else acc + contrib
    h2 = _silu(acc + b2_ref[0])

    # ---- 4) pointwise projection (MXU; BN3 scale folded) + bias + residual --
    h2f = h2.reshape(tb * Ho * Wacc, hidden)           # Wacc % 8 == 0: free merge
    y = jnp.dot(h2f, w2_ref[...], preferred_element_type=jnp.float32)
    y = y + b3_ref[0]
    y4 = y.reshape(tb, Ho, Wacc, Cout)[:, :, :Wo, :]   # drop alignment columns
    if skip_con:
        # Re-read x here (instead of keeping the earlier load live through the
        # depthwise section) so it is not resident at the VMEM/vreg peak.
        y4 = y4 + x_ref[...].reshape(tb, H, W, Cin)
    o_ref[...] = y4.astype(o_ref.dtype)


def _pick_tb(batch, per_image_bytes, *, vmem_budget_bytes=20 << 20, max_tb=8):
    """Images per grid step: stay under a per-step VMEM budget, amortize the
    ~0.35us/step overhead, but keep >= min(batch, 4) grid steps so BlockSpec
    double-buffering can hide DMA and both v7x TensorCores get work."""
    tb = max(1, min(max_tb, batch, vmem_budget_bytes // max(per_image_bytes, 1)))
    while batch % tb:
        tb -= 1
    min_steps = min(batch, 4)
    while tb > 1 and batch // tb < min_steps:
        tb -= 1
        while batch % tb:
            tb -= 1
    return tb


def mv2block_forward(x, w1, bn1, wd, bn2, w2, bn3, *,
                     kernel_size, stride=1, padding=0, skip_con=True, eps=1e-5):
    """Eval-mode MV2Block forward (expansion != 1 branch).

    x: (B, Cin, H, W) NCHW.  Conv weights in torch OIHW layout:
    w1: (hidden, Cin, 1, 1), wd: (hidden, 1, K, K), w2: (Cout, hidden, 1, 1).
    bn* = (gamma, beta, running_mean, running_var).
    """
    B, Cin, H, W = x.shape
    hidden = w1.shape[0]
    Cout = w2.shape[0]
    K = int(kernel_size)
    assert stride in (1, 2)
    if stride != 1:
        # TODO(synk): stride==2 depthwise path (sublane-strided output gather)
        # is not implemented; validate vs lax.conv before enabling.
        raise NotImplementedError("stride == 2 is not implemented in this kernel")
    assert W % 8 == 0, "kernel keeps W sublane-aligned; pad W to a multiple of 8"
    Ho = (H + 2 * padding - K) // stride + 1
    Wo = (W + 2 * padding - K) // stride + 1
    assert 1 <= Ho <= H and 1 <= Wo <= W, "unsupported padding/kernel combination"
    if skip_con:
        assert (Cout, Ho, Wo) == (Cin, H, W), "skip connection requires matching shapes"

    f32 = jnp.float32

    # Inference-mode BN folding: scale goes into the conv weights (one-time
    # O(C*K^2) work out here); only the per-channel bias add stays in the kernel.
    def fold(bn):
        g, b, m, v = (jnp.asarray(t, f32) for t in bn)
        s = g * jax.lax.rsqrt(v + eps)
        return s, b - m * s

    s1, b1 = fold(bn1)
    s2, b2 = fold(bn2)
    s3, b3 = fold(bn3)
    w1f = jnp.asarray(w1, f32)[:, :, 0, 0].T * s1[None, :]                 # (Cin, hidden)
    wdf = jnp.transpose(jnp.asarray(wd, f32)[:, 0], (1, 2, 0)).reshape(K * K, hidden)
    wdf = wdf * s2[None, :]                                                # (K*K, hidden)
    w2f = jnp.asarray(w2, f32)[:, :, 0, 0].T * s3[None, :]                 # (hidden, Cout)
    b1 = b1.reshape(1, hidden)
    b2 = b2.reshape(1, hidden)
    b3 = b3.reshape(1, Cout)

    x_rows = jnp.transpose(x, (0, 2, 3, 1)).reshape(B, H * W, Cin)         # NCHW -> N(HW)C

    Hp = H + 2 * padding
    Wp = W if padding == 0 else _round_up(W + padding, 8)
    Wacc = _round_up(Wo, 8)

    # Rough per-image VMEM working set (hidden-dim slabs dominate); used to pick
    # the batch tile and to set an explicit scoped-VMEM limit.
    slab = Hp * Wp * hidden * 4
    per_image = ((K + 5) * slab
                 + 2 * H * W * max(Cin, 128) * 4          # x block, double-buffered
                 + 2 * Ho * Wacc * max(Cout, 128) * 4)    # out block, double-buffered
    tb = _pick_tb(B, per_image)
    grid = (B // tb,)
    vmem_limit = int(min(max(32 << 20, (5 * tb * per_image) // 4), 96 << 20))

    kernel = functools.partial(
        _mv2_kernel, tb=tb, H=H, W=W, K=K, padding=padding, skip_con=skip_con)

    out = pl.pallas_call(
        kernel,
        out_shape=jax.ShapeDtypeStruct((B, Ho, Wo, Cout), x.dtype),
        grid_spec=pltpu.PrefetchScalarGridSpec(
            num_scalar_prefetch=0,
            grid=grid,
            in_specs=[
                pl.BlockSpec((tb, H * W, Cin), lambda b: (b, 0, 0)),       # x tile
                pl.BlockSpec((Cin, hidden), lambda b: (0, 0)),             # w1 * bn1.scale
                pl.BlockSpec((1, hidden), lambda b: (0, 0)),               # bn1 bias
                pl.BlockSpec((K * K, hidden), lambda b: (0, 0)),           # dw taps * bn2.scale
                pl.BlockSpec((1, hidden), lambda b: (0, 0)),               # bn2 bias
                pl.BlockSpec((hidden, Cout), lambda b: (0, 0)),            # w2 * bn3.scale
                pl.BlockSpec((1, Cout), lambda b: (0, 0)),                 # bn3 bias
            ],
            out_specs=pl.BlockSpec((tb, Ho, Wo, Cout), lambda b: (b, 0, 0, 0)),
            scratch_shapes=[pltpu.VMEM((tb, Hp, Wp, hidden), jnp.float32)],
        ),
        compiler_params=pltpu.CompilerParams(
            dimension_semantics=("parallel",),
            vmem_limit_bytes=vmem_limit),
    )(x_rows, w1f, b1, wdf, b2, w2f, b3)

    return jnp.transpose(out, (0, 3, 1, 2))                                # back to NCHW


def _reference(x, w1, bn1, wd, bn2, w2, bn3, *,
               kernel_size, stride, padding, skip_con, eps=1e-5):
    """Pure-JAX (lax.conv) mirror of the PyTorch eval-mode forward."""
    del kernel_size  # carried by wd

    def bn_apply(y, p):
        g, b, m, v = p
        sh = (1, -1, 1, 1)
        return (y - m.reshape(sh)) * (g.reshape(sh) / jnp.sqrt(v.reshape(sh) + eps)) \
            + b.reshape(sh)

    def silu(y):
        return y * jax.nn.sigmoid(y)

    dn = ("NCHW", "OIHW", "NCHW")
    y = jax.lax.conv_general_dilated(x, w1, (1, 1), "VALID", dimension_numbers=dn)
    y = silu(bn_apply(y, bn1))
    hidden = wd.shape[0]
    y = jax.lax.conv_general_dilated(
        y, wd, (stride, stride), [(padding, padding), (padding, padding)],
        dimension_numbers=dn, feature_group_count=hidden)
    y = silu(bn_apply(y, bn2))
    y = jax.lax.conv_general_dilated(y, w2, (1, 1), "VALID", dimension_numbers=dn)
    y = bn_apply(y, bn3)
    return x + y if skip_con else y


def _make_params(key, in_ch, out_ch, hidden, k):
    ks = jax.random.split(key, 6)

    def bn(k0, n):
        kk = jax.random.split(k0, 4)
        gamma = 1.0 + 0.1 * jax.random.normal(kk[0], (n,), jnp.float32)
        beta = 0.1 * jax.random.normal(kk[1], (n,), jnp.float32)
        mean = 0.1 * jax.random.normal(kk[2], (n,), jnp.float32)
        var = 0.5 + jax.random.uniform(kk[3], (n,), jnp.float32)
        return gamma, beta, mean, var

    w1 = 0.3 * jax.random.normal(ks[0], (hidden, in_ch, 1, 1), jnp.float32)
    wd = 0.3 * jax.random.normal(ks[1], (hidden, 1, k, k), jnp.float32)
    w2 = 0.3 * jax.random.normal(ks[2], (out_ch, hidden, 1, 1), jnp.float32)
    return w1, bn(ks[3], hidden), wd, bn(ks[4], hidden), w2, bn(ks[5], out_ch)


if __name__ == "__main__":
    B, Cin, H, W = 2, 8, 16, 16
    Cout = 8
    expansion = 16
    hidden = Cin * expansion          # 128: lane-dense hidden dim

    configs = [
        # Module defaults (kernel_size=2, stride=1, padding=0): spatial shrinks by 1,
        # so the residual cannot apply -> exercises the skip_con=False path.
        dict(kernel_size=2, stride=1, padding=0, skip_con=False),
        # Shape-preserving config exercising the `x + conv(x)` residual path.
        dict(kernel_size=3, stride=1, padding=1, skip_con=True),
    ]

    root = jax.random.PRNGKey(0)
    kx, kp = jax.random.split(root)
    x = jax.random.normal(kx, (B, Cin, H, W), jnp.float32)

    for idx, cfg in enumerate(configs):
        params = _make_params(jax.random.fold_in(kp, idx), Cin, Cout, hidden,
                              cfg["kernel_size"])
        fwd = jax.jit(functools.partial(mv2block_forward, **cfg))
        out = jax.block_until_ready(fwd(x, *params))
        ref = _reference(x, *params, **cfg)
        assert out.shape == ref.shape, (out.shape, ref.shape)
        err = float(jnp.max(jnp.abs(out - ref)))
        # Tolerance covers the approximate EUP reciprocal inside the two SiLUs;
        # any structural/indexing bug would be orders of magnitude larger.
        assert jnp.allclose(out, ref, atol=2e-2, rtol=2e-2), \
            f"config {idx}: mismatch vs reference (max abs err {err})"

    print("KERNEL_OK")
</pallas_src>

<mosaic_0001>
module attributes {stable_mosaic.version = 11 : i64} {
  func.func @_mv2_kernel(%arg0: i32, %arg1: memref<1x256x8xf32, #tpu.memory_space<vmem>>, %arg2: memref<8x128xf32, #tpu.memory_space<vmem>>, %arg3: memref<1x128xf32, #tpu.memory_space<vmem>>, %arg4: memref<4x128xf32, #tpu.memory_space<vmem>>, %arg5: memref<1x128xf32, #tpu.memory_space<vmem>>, %arg6: memref<128x8xf32, #tpu.memory_space<vmem>>, %arg7: memref<1x8xf32, #tpu.memory_space<vmem>>, %arg8: memref<1x15x15x8xf32, #tpu.memory_space<vmem>>, %arg9: memref<1x16x16x128xf32, #tpu.memory_space<vmem>>) attributes {dimension_semantics = [#tpu.dimension_semantics<parallel>], iteration_bounds = array<i64: 2>, scalar_prefetch = 0 : i64, scratch_operands = 1 : i64, tpu.core_type = #tpu.core_type<tc>, window_params = [{transform_indices = @transform_0, window_bounds = array<i64: 1, 256, 8>}, {pipeline_mode = #tpu.pipeline_mode<synchronous>, transform_indices = @transform_1, window_bounds = array<i64: 8, 128>}, {pipeline_mode = #tpu.pipeline_mode<synchronous>, transform_indices = @transform_2, window_bounds = array<i64: 1, 128>}, {pipeline_mode = #tpu.pipeline_mode<synchronous>, transform_indices = @transform_3, window_bounds = array<i64: 4, 128>}, {pipeline_mode = #tpu.pipeline_mode<synchronous>, transform_indices = @transform_4, window_bounds = array<i64: 1, 128>}, {pipeline_mode = #tpu.pipeline_mode<synchronous>, transform_indices = @transform_5, window_bounds = array<i64: 128, 8>}, {pipeline_mode = #tpu.pipeline_mode<synchronous>, transform_indices = @transform_6, window_bounds = array<i64: 1, 8>}, {transform_indices = @transform_7, window_bounds = array<i64: 1, 15, 15, 8>}]} {
    %c0 = arith.constant 0 : index
    %c0_0 = arith.constant 0 : index
    %c0_1 = arith.constant 0 : index
    %0 = vector.load %arg1[%c0, %c0_0, %c0_1] : memref<1x256x8xf32, #tpu.memory_space<vmem>>, vector<1x256x8xf32>
    %1 = vector.shape_cast %0 : vector<1x256x8xf32> to vector<256x8xf32>
    %c0_2 = arith.constant 0 : index
    %c0_3 = arith.constant 0 : index
    %2 = vector.load %arg2[%c0_2, %c0_3] : memref<8x128xf32, #tpu.memory_space<vmem>>, vector<8x128xf32>
    %cst = arith.constant dense<0.000000e+00> : vector<256x128xf32>
    %3 = tpu.matmul %1, %2, %cst {dimension_numbers = #tpu.dot_dimension_numbers<[1], [0], [0], [1], [0, 0, 1, 1], [], []>} : vector<256x8xf32>, vector<8x128xf32>, vector<256x128xf32> -> vector<256x128xf32>
    %c0_4 = arith.constant 0 : index
    %c0_5 = arith.constant 0 : index
    %4 = vector.load %arg3[%c0_4, %c0_5] : memref<1x128xf32, #tpu.memory_space<vmem>>, vector<1x128xf32>
    %5 = vector.shape_cast %4 : vector<1x128xf32> to vector<128xf32>
    %6 = vector.shape_cast %5 : vector<128xf32> to vector<1x128xf32>
    %7 = vector.broadcast %6 : vector<1x128xf32> to vector<256x128xf32>
    %8 = arith.addf %3, %7 : vector<256x128xf32>
    %cst_6 = arith.constant 0.000000e+00 : f32
    %9 = vector.broadcast %cst_6 : f32 to vector<256x128xf32>
    %10 = arith.subf %9, %8 : vector<256x128xf32>
    %11 = math.exp %10 : vector<256x128xf32>
    %cst_7 = arith.constant 1.000000e+00 : f32
    %12 = vector.broadcast %cst_7 : f32 to vector<256x128xf32>
    %13 = arith.addf %12, %11 : vector<256x128xf32>
    %14 = tpu.reciprocal %13 {approx = true} : vector<256x128xf32> -> vector<256x128xf32>
    %15 = arith.mulf %8, %14 : vector<256x128xf32>
    %16 = vector.shape_cast %15 : vector<256x128xf32> to vector<1x16x16x128xf32>
    %c0_8 = arith.constant 0 : index
    %c0_9 = arith.constant 0 : index
    %c0_10 = arith.constant 0 : index
    %c0_11 = arith.constant 0 : index
    %17 = vector.load %arg9[%c0_8, %c0_9, %c0_10, %c0_11] : memref<1x16x16x128xf32, #tpu.memory_space<vmem>>, vector<1x16x16x128xf32>
    tpu.vector_store %arg9[%c0_8, %c0_9, %c0_10, %c0_11], %16 {strides = array<i32>} : memref<1x16x16x128xf32, #tpu.memory_space<vmem>>, vector<1x16x16x128xf32>,
    %c0_12 = arith.constant 0 : index
    %c0_13 = arith.constant 0 : index
    %c0_14 = arith.constant 0 : index
    %c0_15 = arith.constant 0 : index
    %18 = vector.load %arg9[%c0_12, %c0_13, %c0_14, %c0_15] : memref<1x16x16x128xf32, #tpu.memory_space<vmem>>, vector<1x16x16x128xf32>
    %c0_16 = arith.constant 0 : index
    %c0_17 = arith.constant 0 : index
    %19 = vector.load %arg4[%c0_16, %c0_17] : memref<4x128xf32, #tpu.memory_space<vmem>>, vector<4x128xf32>
    %20 = vector.extract_strided_slice %18 {offsets = [0, 0, 0, 0], sizes = [1, 15, 16, 128], strides = [1, 1, 1, 1]} : vector<1x16x16x128xf32> to vector<1x15x16x128xf32>
    %21 = vector.extract_strided_slice %19 {offsets = [0, 0], sizes = [1, 128], strides = [1, 1]} : vector<4x128xf32> to vector<1x128xf32>
    %22 = vector.shape_cast %21 : vector<1x128xf32> to vector<128xf32>
    %23 = vector.shape_cast %22 : vector<128xf32> to vector<1x1x1x128xf32>
    %24 = vector.broadcast %23 : vector<1x1x1x128xf32> to vector<1x15x16x128xf32>
    %25 = arith.mulf %20, %24 : vector<1x15x16x128xf32>
    %26 = vector.extract_strided_slice %18 {offsets = [0, 1, 0, 0], sizes = [1, 15, 16, 128], strides = [1, 1, 1, 1]} : vector<1x16x16x128xf32> to vector<1x15x16x128xf32>
    %27 = vector.extract_strided_slice %19 {offsets = [2, 0], sizes = [1, 128], strides = [1, 1]} : vector<4x128xf32> to vector<1x128xf32>
    %28 = vector.shape_cast %27 : vector<1x128xf32> to vector<128xf32>
    %29 = vector.shape_cast %28 : vector<128xf32> to vector<1x1x1x128xf32>
    %30 = vector.broadcast %29 : vector<1x1x1x128xf32> to vector<1x15x16x128xf32>
    %31 = arith.mulf %26, %30 : vector<1x15x16x128xf32>
    %32 = arith.addf %25, %31 : vector<1x15x16x128xf32>
    %c15_i32 = arith.constant 15 : i32
    %33 = tpu.dynamic_rotate %18 by %c15_i32 dim 2 : vector<1x16x16x128xf32>, i32 -> vector<1x16x16x128xf32>
    %34 = vector.extract_strided_slice %33 {offsets = [0, 0, 0, 0], sizes = [1, 15, 16, 128], strides = [1, 1, 1, 1]} : vector<1x16x16x128xf32> to vector<1x15x16x128xf32>
    %35 = vector.extract_strided_slice %19 {offsets = [1, 0], sizes = [1, 128], strides = [1, 1]} : vector<4x128xf32> to vector<1x128xf32>
    %36 = vector.shape_cast %35 : vector<1x128xf32> to vector<128xf32>
    %37 = vector.shape_cast %36 : vector<128xf32> to vector<1x1x1x128xf32>
    %38 = vector.broadcast %37 : vector<1x1x1x128xf32> to vector<1x15x16x128xf32>
    %39 = arith.mulf %34, %38 : vector<1x15x16x128xf32>
    %40 = arith.addf %32, %39 : vector<1x15x16x128xf32>
    %41 = vector.extract_strided_slice %33 {offsets = [0, 1, 0, 0], sizes = [1, 15, 16, 128], strides = [1, 1, 1, 1]} : vector<1x16x16x128xf32> to vector<1x15x16x128xf32>
    %42 = vector.extract_strided_slice %19 {offsets = [3, 0], sizes = [1, 128], strides = [1, 1]} : vector<4x128xf32> to vector<1x128xf32>
    %43 = vector.shape_cast %42 : vector<1x128xf32> to vector<128xf32>
    %44 = vector.shape_cast %43 : vector<128xf32> to vector<1x1x1x128xf32>
    %45 = vector.broadcast %44 : vector<1x1x1x128xf32> to vector<1x15x16x128xf32>
    %46 = arith.mulf %41, %45 : vector<1x15x16x128xf32>
    %47 = arith.addf %40, %46 : vector<1x15x16x128xf32>
    %c0_18 = arith.constant 0 : index
    %c0_19 = arith.constant 0 : index
    %48 = vector.load %arg5[%c0_18, %c0_19] : memref<1x128xf32, #tpu.memory_space<vmem>>, vector<1x128xf32>
    %49 = vector.shape_cast %48 : vector<1x128xf32> to vector<128xf32>
    %50 = vector.shape_cast %49 : vector<128xf32> to vector<1x1x1x128xf32>
    %51 = vector.broadcast %50 : vector<1x1x1x128xf32> to vector<1x15x16x128xf32>
    %52 = arith.addf %47, %51 : vector<1x15x16x128xf32>
    %cst_20 = arith.constant 0.000000e+00 : f32
    %53 = vector.broadcast %cst_20 : f32 to vector<1x15x16x128xf32>
    %54 = arith.subf %53, %52 : vector<1x15x16x128xf32>
    %55 = math.exp %54 : vector<1x15x16x128xf32>
    %cst_21 = arith.constant 1.000000e+00 : f32
    %56 = vector.broadcast %cst_21 : f32 to vector<1x15x16x128xf32>
    %57 = arith.addf %56, %55 : vector<1x15x16x128xf32>
    %58 = tpu.reciprocal %57 {approx = true} : vector<1x15x16x128xf32> -> vector<1x15x16x128xf32>
    %59 = arith.mulf %52, %58 : vector<1x15x16x128xf32>
    %60 = vector.shape_cast %59 : vector<1x15x16x128xf32> to vector<240x128xf32>
    %c0_22 = arith.constant 0 : index
    %c0_23 = arith.constant 0 : index
    %61 = vector.load %arg6[%c0_22, %c0_23] : memref<128x8xf32, #tpu.memory_space<vmem>>, vector<128x8xf32>
    %cst_24 = arith.constant dense<0.000000e+00> : vector<240x8xf32>
    %62 = tpu.matmul %60, %61, %cst_24 {dimension_numbers = #tpu.dot_dimension_numbers<[1], [0], [0], [1], [0, 0, 1, 1], [], []>} : vector<240x128xf32>, vector<128x8xf32>, vector<240x8xf32> -> vector<240x8xf32>
    %c0_25 = arith.constant 0 : index
    %c0_26 = arith.constant 0 : index
    %63 = vector.load %arg7[%c0_25, %c0_26] : memref<1x8xf32, #tpu.memory_space<vmem>>, vector<1x8xf32>
    %64 = vector.shape_cast %63 : vector<1x8xf32> to vector<8xf32>
    %65 = vector.shape_cast %64 : vector<8xf32> to vector<1x8xf32>
    %66 = vector.broadcast %65 : vector<1x8xf32> to vector<240x8xf32>
    %67 = arith.addf %62, %66 : vector<240x8xf32>
    %68 = vector.shape_cast %67 : vector<240x8xf32> to vector<1x15x16x8xf32>
    %69 = vector.extract_strided_slice %68 {offsets = [0, 0, 0, 0], sizes = [1, 15, 15, 8], strides = [1, 1, 1, 1]} : vector<1x15x16x8xf32> to vector<1x15x15x8xf32>
    %c0_27 = arith.constant 0 : index
    %c0_28 = arith.constant 0 : index
    %c0_29 = arith.constant 0 : index
    %c0_30 = arith.constant 0 : index
    %70 = vector.load %arg8[%c0_27, %c0_28, %c0_29, %c0_30] : memref<1x15x15x8xf32, #tpu.memory_space<vmem>>, vector<1x15x15x8xf32>
    tpu.vector_store %arg8[%c0_27, %c0_28, %c0_29, %c0_30], %69 {strides = array<i32>} : memref<1x15x15x8xf32, #tpu.memory_space<vmem>>, vector<1x15x15x8xf32>,
    return
  }
  func.func @transform_0(%arg0: i32) -> (i32, i32, i32) {
    %c0_i32 = arith.constant 0 : i32
    %c0_i32_0 = arith.constant 0 : i32
    %c0_i32_1 = arith.constant 0 : i32
    return %arg0, %c0_i32, %c0_i32_0 : i32, i32, i32
  }
  func.func @transform_1(%arg0: i32) -> (i32, i32) {
    %c0_i32 = arith.constant 0 : i32
    %c0_i32_0 = arith.constant 0 : i32
    %c0_i32_1 = arith.constant 0 : i32
    return %c0_i32, %c0_i32_0 : i32, i32
  }
  func.func @transform_2(%arg0: i32) -> (i32, i32) {
    %c0_i32 = arith.constant 0 : i32
    %c0_i32_0 = arith.constant 0 : i32
    %c0_i32_1 = arith.constant 0 : i32
    return %c0_i32, %c0_i32_0 : i32, i32
  }
  func.func @transform_3(%arg0: i32) -> (i32, i32) {
    %c0_i32 = arith.constant 0 : i32
    %c0_i32_0 = arith.constant 0 : i32
    %c0_i32_1 = arith.constant 0 : i32
    return %c0_i32, %c0_i32_0 : i32, i32
  }
  func.func @transform_4(%arg0: i32) -> (i32, i32) {
    %c0_i32 = arith.constant 0 : i32
    %c0_i32_0 = arith.constant 0 : i32
    %c0_i32_1 = arith.constant 0 : i32
    return %c0_i32, %c0_i32_0 : i32, i32
  }
  func.func @transform_5(%arg0: i32) -> (i32, i32) {
    %c0_i32 = arith.constant 0 : i32
    %c0_i32_0 = arith.constant 0 : i32
    %c0_i32_1 = arith.constant 0 : i32
    return %c0_i32, %c0_i32_0 : i32, i32
  }
  func.func @transform_6(%arg0: i32) -> (i32, i32) {
    %c0_i32 = arith.constant 0 : i32
    %c0_i32_0 = arith.constant 0 : i32
    %c0_i32_1 = arith.constant 0 : i32
    return %c0_i32, %c0_i32_0 : i32, i32
  }
  func.func @transform_7(%arg0: i32) -> (i32, i32, i32, i32) {
    %c0_i32 = arith.constant 0 : i32
    %c0_i32_0 = arith.constant 0 : i32
    %c0_i32_1 = arith.constant 0 : i32
    %c0_i32_2 = arith.constant 0 : i32
    return %arg0, %c0_i32, %c0_i32_0, %c0_i32_1 : i32, i32, i32, i32
  }
}

</mosaic_0001>

<llo_original>
// kernel: mv2block_forward.1
$region0: #{mv2block_forward.1}
  #allocation0 [shape = 'u32[]', space=smem, size = 0x4, offset = 0x4, fixed_abs, tag = 'smem constant byte address 0x4 - core index']
  #allocation1 [shape = 'u32[72,128]{1,0:T(1,128)}', space=vmem, size = 0x9000, scoped, tag = 'internal scratch']
  #allocation2 [shape = 'f32[1,16,16,128]{3,2,1,0:T(8,128)}', space=vmem, size = 0x20000, scoped, tag = 'scratch operand']
  %s0 = inlined_call_operand.vmem [shape: f32[2,256,8], index: 0, kind: input, shape index: {}]
  %s1 = inlined_call_operand.vmem [shape: f32[8,128], index: 1, kind: input, shape index: {}]
  %s2 = inlined_call_operand.vmem [shape: f32[1,128], index: 2, kind: input, shape index: {}]
  %s3 = inlined_call_operand.vmem [shape: f32[4,128], index: 3, kind: input, shape index: {}]
  %s4 = inlined_call_operand.vmem [shape: f32[1,128], index: 4, kind: input, shape index: {}]
  %s5 = inlined_call_operand.vmem [shape: f32[128,8], index: 5, kind: input, shape index: {}]
  %s6 = inlined_call_operand.vmem [shape: f32[1,8], index: 6, kind: input, shape index: {}]
  %s7 = inlined_call_operand.vmem [shape: f32[2,15,15,8], index: 7, kind: output, shape index: {}]
  %s8 = sld [smem:[#allocation0]]
  $region61: #{mv2block_forward.1} parent=0
    _
  %s10 = ssub.s32 1, %s8
  %s11 = scalar_select 0, %s10, %s8
  loop: start=0, step=1, limit=4
  $region2: #{mv2block_forward.1} parent=0 // loop_pre_header
    _
  $region3: #{mv2block_forward.1} parent=0 // loop_header
    %s13 = sphi 0, %s17
    %p14 = scmp.ge.s32.totalorder %s13, 4
    %s23 = sphi 0, %s25
    %s26 = sphi 0, %s23
    %s27 = sphi 0, %s26
    %s43 = sphi 0, %s27
    %s47 = sphi 0, %s47
    %s49 = sphi 0, %s47
    %s50 = sphi 0, %s49
    %s64 = sphi 0, %s50
    %s68 = sphi 0, %s68
    %s70 = sphi 0, %s68
    %s71 = sphi 0, %s70
    %s85 = sphi 0, %s71
    %s89 = sphi 0, %s89
    %s91 = sphi 0, %s89
    %s92 = sphi 0, %s91
    %s106 = sphi 0, %s92
    %s110 = sphi 0, %s110
    %s112 = sphi 0, %s110
    %s113 = sphi 0, %s112
    %s127 = sphi 0, %s113
    %s131 = sphi 0, %s131
    %s133 = sphi 0, %s131
    %s134 = sphi 0, %s133
    %s148 = sphi 0, %s134
    %s152 = sphi 0, %s152
    %s154 = sphi 0, %s152
    %s155 = sphi 0, %s154
    %s169 = sphi 0, %s155
    %s175 = sphi 0, %s177
    %s178 = sphi 0, %s175
    %s179 = sphi 0, %s178
    %s195 = sphi 0, %s179
  $region4: #{mv2block_forward.1} parent=0 // loop_header_branch
    %16 = sbr.rel (%p14) target = $region8
  $region5: #{mv2block_forward.1} parent=0 // loop_body
    %s18 = ssub.s32 %s13, 1
    %s19 = ssub.s32 %s13, 2
    %s20 = sadd.s32 %s13, 1
    %s21 = ssub.s32 %s13, %s20
    %p22 = scmp.eq.s32.totalorder %s21, 0
    %s24 = sadd.s32 %s23, 1
    %s25 = scalar_select %p22, %s23, %s24
    %p28 = pneg %p22
    %p29 = scmp.eq.s32.totalorder %s13, 1
    %p30 = por %p28, %p29
    %p31 = scmp.ne.s32.totalorder %s23, %s26
    %p32 = scmp.eq.s32.totalorder %s13, 0
    %p33 = por %p31, %p32
    %p34 = scmp.ne.s32.totalorder %s23, %s26
    %p35 = scmp.eq.s32.totalorder %s18, 1
    %p36 = por %p34, %p35
    %p37 = scmp.ne.s32.totalorder %s26, %s27
    %p38 = scmp.eq.s32.totalorder %s18, 0
    %p39 = por %p37, %p38
    %p40 = scmp.ne.s32.totalorder %s26, %s27
    %p41 = scmp.eq.s32.totalorder %s19, 1
    %p42 = por %p40, %p41
    %p44 = scmp.ne.s32.totalorder %s27, %s43
    %p45 = scmp.eq.s32.totalorder %s19, 0
    %p46 = por %p44, %p45
    %s48 = sadd.s32 %s47, 1
    %p51 = scmp.eq.s32.totalorder %s13, 1
    %p52 = scmp.ne.s32.totalorder %s47, %s49
    %p53 = scmp.eq.s32.totalorder %s13, 0
    %p54 = por %p52, %p53
    %p55 = scmp.ne.s32.totalorder %s47, %s49
    %p56 = scmp.eq.s32.totalorder %s18, 1
    %p57 = por %p55, %p56
    %p58 = scmp.ne.s32.totalorder %s49, %s50
    %p59 = scmp.eq.s32.totalorder %s18, 0
    %p60 = por %p58, %p59
    %p61 = scmp.ne.s32.totalorder %s49, %s50
    %p62 = scmp.eq.s32.totalorder %s19, 1
    %p63 = por %p61, %p62
    %p65 = scmp.ne.s32.totalorder %s50, %s64
    %p66 = scmp.eq.s32.totalorder %s19, 0
    %p67 = por %p65, %p66
    %s69 = sadd.s32 %s68, 1
    %p72 = scmp.eq.s32.totalorder %s13, 1
    %p73 = scmp.ne.s32.totalorder %s68, %s70
    %p74 = scmp.eq.s32.totalorder %s13, 0
    %p75 = por %p73, %p74
    %p76 = scmp.ne.s32.totalorder %s68, %s70
    %p77 = scmp.eq.s32.totalorder %s18, 1
    %p78 = por %p76, %p77
    %p79 = scmp.ne.s32.totalorder %s70, %s71
    %p80 = scmp.eq.s32.totalorder %s18, 0
    %p81 = por %p79, %p80
    %p82 = scmp.ne.s32.totalorder %s70, %s71
    %p83 = scmp.eq.s32.totalorder %s19, 1
    %p84 = por %p82, %p83
    %p86 = scmp.ne.s32.totalorder %s71, %s85
    %p87 = scmp.eq.s32.totalorder %s19, 0
    %p88 = por %p86, %p87
    %s90 = sadd.s32 %s89, 1
    %p93 = scmp.eq.s32.totalorder %s13, 1
    %p94 = scmp.ne.s32.totalorder %s89, %s91
    %p95 = scmp.eq.s32.totalorder %s13, 0
    %p96 = por %p94, %p95
    %p97 = scmp.ne.s32.totalorder %s89, %s91
    %p98 = scmp.eq.s32.totalorder %s18, 1
    %p99 = por %p97, %p98
    %p100 = scmp.ne.s32.totalorder %s91, %s92
    %p101 = scmp.eq.s32.totalorder %s18, 0
    %p102 = por %p100, %p101
    %p103 = scmp.ne.s32.totalorder %s91, %s92
    %p104 = scmp.eq.s32.totalorder %s19, 1
    %p105 = por %p103, %p104
    %p107 = scmp.ne.s32.totalorder %s92, %s106
    %p108 = scmp.eq.s32.totalorder %s19, 0
    %p109 = por %p107, %p108
    %s111 = sadd.s32 %s110, 1
    %p114 = scmp.eq.s32.totalorder %s13, 1
    %p115 = scmp.ne.s32.totalorder %s110, %s112
    %p116 = scmp.eq.s32.totalorder %s13, 0
    %p117 = por %p115, %p116
    %p118 = scmp.ne.s32.totalorder %s110, %s112
    %p119 = scmp.eq.s32.totalorder %s18, 1
    %p120 = por %p118, %p119
    %p121 = scmp.ne.s32.totalorder %s112, %s113
    %p122 = scmp.eq.s32.totalorder %s18, 0
    %p123 = por %p121, %p122
    %p124 = scmp.ne.s32.totalorder %s112, %s113
    %p125 = scmp.eq.s32.totalorder %s19, 1
    %p126 = por %p124, %p125
    %p128 = scmp.ne.s32.totalorder %s113, %s127
    %p129 = scmp.eq.s32.totalorder %s19, 0
    %p130 = por %p128, %p129
    %s132 = sadd.s32 %s131, 1
    %p135 = scmp.eq.s32.totalorder %s13, 1
    %p136 = scmp.ne.s32.totalorder %s131, %s133
    %p137 = scmp.eq.s32.totalorder %s13, 0
    %p138 = por %p136, %p137
    %p139 = scmp.ne.s32.totalorder %s131, %s133
    %p140 = scmp.eq.s32.totalorder %s18, 1
    %p141 = por %p139, %p140
    %p142 = scmp.ne.s32.totalorder %s133, %s134
    %p143 = scmp.eq.s32.totalorder %s18, 0
    %p144 = por %p142, %p143
    %p145 = scmp.ne.s32.totalorder %s133, %s134
    %p146 = scmp.eq.s32.totalorder %s19, 1
    %p147 = por %p145, %p146
    %p149 = scmp.ne.s32.totalorder %s134, %s148
    %p150 = scmp.eq.s32.totalorder %s19, 0
    %p151 = por %p149, %p150
    %s153 = sadd.s32 %s152, 1
    %p156 = scmp.eq.s32.totalorder %s13, 1
    %p157 = scmp.ne.s32.totalorder %s152, %s154
    %p158 = scmp.eq.s32.totalorder %s13, 0
    %p159 = por %p157, %p158
    %p160 = scmp.ne.s32.totalorder %s152, %s154
    %p161 = scmp.eq.s32.totalorder %s18, 1
    %p162 = por %p160, %p161
    %p163 = scmp.ne.s32.totalorder %s154, %s155
    %p164 = scmp.eq.s32.totalorder %s18, 0
    %p165 = por %p163, %p164
    %p166 = scmp.ne.s32.totalorder %s154, %s155
    %p167 = scmp.eq.s32.totalorder %s19, 1
    %p168 = por %p166, %p167
    %p170 = scmp.ne.s32.totalorder %s155, %s169
    %p171 = scmp.eq.s32.totalorder %s19, 0
    %p172 = por %p170, %p171
    %s173 = ssub.s32 %s13, %s20
    %p174 = scmp.eq.s32.totalorder %s173, 0
    %s176 = sadd.s32 %s175, 1
    %s177 = scalar_select %p174, %s175, %s176
    %p180 = pneg %p174
    %p181 = scmp.eq.s32.totalorder %s13, 1
    %p182 = por %p180, %p181
    %p183 = scmp.ne.s32.totalorder %s175, %s178
    %p184 = scmp.eq.s32.totalorder %s13, 0
    %p185 = por %p183, %p184
    %p186 = scmp.ne.s32.totalorder %s175, %s178
    %p187 = scmp.eq.s32.totalorder %s18, 1
    %p188 = por %p186, %p187
    %p189 = scmp.ne.s32.totalorder %s178, %s179
    %p190 = scmp.eq.s32.totalorder %s18, 0
    %p191 = por %p189, %p190
    %p192 = scmp.ne.s32.totalorder %s178, %s179
    %p193 = scmp.eq.s32.totalorder %s19, 1
    %p194 = por %p192, %p193
    %p196 = scmp.ne.s32.totalorder %s179, %s195
    %p197 = scmp.eq.s32.totalorder %s19, 0
    %p198 = por %p196, %p197
    %p199 = scmp.le.s32.totalorder 1, %s13
    %p200 = scmp.lt.s32.totalorder %s13, 3
    %p201 = pnand %p199, %p200
    %p202 = pneg %p201
    // Predicated region
    $region9: #{mv2block_forward.1} parent=5 // pred_check
      _
    $region10: #{mv2block_forward.1} parent=5 // pred_check_branch
      %204 = sbr.rel (%p201) target = $region12
    $region11: #{mv2block_forward.1} parent=5 // pred_region
      %s205 = ssub.s32 %s13, 1
      // Predicated region
      $region13: #{mv2block_forward.1} parent=11 // pred_check
        %p206 = pneg %p60
      $region14: #{mv2block_forward.1} parent=11 // pred_check_branch
        %208 = sbr.rel (%p206) target = $region16
      $region15: #{mv2block_forward.1} parent=11 // pred_region
        _
      $region16: #{mv2block_forward.1} parent=11 // pred_fallthru
        _
      // Predicated region
      $region17: #{mv2block_forward.1} parent=11 // pred_check
        %p209 = pneg %p81
      $region18: #{mv2block_forward.1} parent=11 // pred_check_branch
        %211 = sbr.rel (%p209) target = $region20
      $region19: #{mv2block_forward.1} parent=11 // pred_region
        _
      $region20: #{mv2block_forward.1} parent=11 // pred_fallthru
        _
      // Predicated region
      $region21: #{mv2block_forward.1} parent=11 // pred_check
        %p212 = pneg %p102
      $region22: #{mv2block_forward.1} parent=11 // pred_check_branch
        %214 = sbr.rel (%p212) target = $region24
      $region23: #{mv2block_forward.1} parent=11 // pred_region
        _
      $region24: #{mv2block_forward.1} parent=11 // pred_fallthru
        _
      // Predicated region
      $region25: #{mv2block_forward.1} parent=11 // pred_check
        %p215 = pneg %p123
      $region26: #{mv2block_forward.1} parent=11 // pred_check_branch
        %217 = sbr.rel (%p215) target = $region28
      $region27: #{mv2block_forward.1} parent=11 // pred_region
        _
      $region28: #{mv2block_forward.1} parent=11 // pred_fallthru
        _
      // Predicated region
      $region29: #{mv2block_forward.1} parent=11 // pred_check
        %p218 = pneg %p144
      $region30: #{mv2block_forward.1} parent=11 // pred_check_branch
        %220 = sbr.rel (%p218) target = $region32
      $region31: #{mv2block_forward.1} parent=11 // pred_region
        _
      $region32: #{mv2block_forward.1} parent=11 // pred_fallthru
        _
      // Predicated region
      $region33: #{mv2block_forward.1} parent=11 // pred_check
        %p221 = pneg %p165
      $region34: #{mv2block_forward.1} parent=11 // pred_check_branch
        %223 = sbr.rel (%p221) target = $region36
      $region35: #{mv2block_forward.1} parent=11 // pred_region
        _
      $region36: #{mv2block_forward.1} parent=11 // pred_fallthru
        _
    $region12: #{mv2block_forward.1} parent=5 // pred_fallthru
      _
    %p224 = scmp.lt.s32.totalorder %s13, 2
    // Predicated region
    $region37: #{mv2block_forward.1} parent=5 // pred_check
      %p225 = pneg %p224
    $region38: #{mv2block_forward.1} parent=5 // pred_check_branch
      %227 = sbr.rel (%p225) target = $region40
    $region39: #{mv2block_forward.1} parent=5 // pred_region
      // Predicated region
      $region41: #{mv2block_forward.1} parent=39 // pred_check
        %p228 = pneg %p33
      $region42: #{mv2block_forward.1} parent=39 // pred_check_branch
        %230 = sbr.rel (%p228) target = $region44
      $region43: #{mv2block_forward.1} parent=39 // pred_region
        %p231 = scmp.lt.s32.totalorder %s13, 1
        %s232 = scalar_select %p231, %s13, 1
        %s233 = smul.addr %s232, 32
        %s234 = smul.addr %s233, 8
        %s235 = scalar_lea.vmem %s0, %s234
      $region44: #{mv2block_forward.1} parent=39 // pred_fallthru
        _
    $region40: #{mv2block_forward.1} parent=5 // pred_fallthru
      _
    %p236 = scmp.le.s32.totalorder 1, %s13
    %p237 = scmp.lt.s32.totalorder %s13, 3
    %p238 = pnand %p236, %p237
    %p239 = pneg %p238
    // Predicated region
    $region45: #{mv2block_forward.1} parent=5 // pred_check
      _
    $region46: #{mv2block_forward.1} parent=5 // pred_check_branch
      %241 = sbr.rel (%p238) target = $region48
    $region47: #{mv2block_forward.1} parent=5 // pred_region
      %s242 = ssub.s32 %s13, 1
      %p243 = scmp.lt.s32.totalorder %s18, 1
      %s244 = scalar_select %p243, %s18, 1
      %s245 = smul.addr %s244, 32
      %s246 = smul.addr %s245, 8
      %s247 = scalar_lea.vmem %s0, %s246
      %p248 = pneg %p39
      %p249 = pneg %p36
      %p250 = pneg %p60
      %p251 = pneg %p57
      %p252 = pneg %p81
      %p253 = pneg %p78
      %p254 = pneg %p102
      %p255 = pneg %p99
      %p256 = pneg %p123
      %p257 = pneg %p120
      %p258 = pneg %p144
      %p259 = pneg %p141
      %p260 = pneg %p165
      %p261 = pneg %p162
      %p262 = pneg %p191
      %p263 = pneg %p188
      %p264 = scmp.lt.s32.totalorder %s18, 1
      %s265 = scalar_select %p264, %s18, 1
      %s266 = smul.addr %s265, 30
      %s267 = smul.addr %s266, 8
      %s268 = scalar_lea.vmem %s7, %s267
      %p269 = scmp.lt.s32.totalorder %s18, 1
      %s270 = scalar_select %p269, %s18, 1
      %s271 = smul.addr %s270, 32
      %s272 = smul.addr %s271, 8
      %s273 = scalar_lea.vmem %s0, %s272
      %p274 = scmp.lt.s32.totalorder %s18, 1
      %s275 = scalar_select %p274, %s18, 1
      %s276 = smul.addr %s275, 30
      %s277 = smul.addr %s276, 8
      %s278 = scalar_lea.vmem %s7, %s277
      %v279 = vld [vmem:[%s273] sm:$0xff]
      %v280 = vld [vmem:[%s273 + $0x8] sm:$0xff]
      %v281 = vld [vmem:[%s273 + $0x10] sm:$0xff]
      %v282 = vld [vmem:[%s273 + $0x18] sm:$0xff]
      %v283 = vld [vmem:[%s273 + $0x20] sm:$0xff]
      %v284 = vld [vmem:[%s273 + $0x28] sm:$0xff]
      %v285 = vld [vmem:[%s273 + $0x30] sm:$0xff]
      %v286 = vld [vmem:[%s273 + $0x38] sm:$0xff]
      %v287 = vld [vmem:[%s273 + $0x40] sm:$0xff]
      %v288 = vld [vmem:[%s273 + $0x48] sm:$0xff]
      %v289 = vld [vmem:[%s273 + $0x50] sm:$0xff]
      %v290 = vld [vmem:[%s273 + $0x58] sm:$0xff]
      %v291 = vld [vmem:[%s273 + $0x60] sm:$0xff]
      %v292 = vld [vmem:[%s273 + $0x68] sm:$0xff]
      %v293 = vld [vmem:[%s273 + $0x70] sm:$0xff]
      %v294 = vld [vmem:[%s273 + $0x78] sm:$0xff]
      %v295 = vld [vmem:[%s273 + $0x80] sm:$0xff]
      %v296 = vld [vmem:[%s273 + $0x88] sm:$0xff]
      %v297 = vld [vmem:[%s273 + $0x90] sm:$0xff]
      %v298 = vld [vmem:[%s273 + $0x98] sm:$0xff]
      %v299 = vld [vmem:[%s273 + $0xa0] sm:$0xff]
      %v300 = vld [vmem:[%s273 + $0xa8] sm:$0xff]
      %v301 = vld [vmem:[%s273 + $0xb0] sm:$0xff]
      %v302 = vld [vmem:[%s273 + $0xb8] sm:$0xff]
      %v303 = vld [vmem:[%s273 + $0xc0] sm:$0xff]
      %v304 = vld [vmem:[%s273 + $0xc8] sm:$0xff]
      %v305 = vld [vmem:[%s273 + $0xd0] sm:$0xff]
      %v306 = vld [vmem:[%s273 + $0xd8] sm:$0xff]
      %v307 = vld [vmem:[%s273 + $0xe0] sm:$0xff]
      %v308 = vld [vmem:[%s273 + $0xe8] sm:$0xff]
      %v309 = vld [vmem:[%s273 + $0xf0] sm:$0xff]
      %v310 = vld [vmem:[%s273 + $0xf8] sm:$0xff]
      %v311 = vld [vmem:[%s1] sm:$0xff]
      %v312 = vld [vmem:[%s2] sm:$0x1]
      %v314 = vperm.slane %v312, 0
      %vm316 = vcmask 64512
      %v318 = vsel %vm316, %v279, 0
      %v321 = vsel %vm316, %v280, 0
      %v324 = vsel %vm316, %v281, 0
      %v327 = vsel %vm316, %v282, 0
      %v330 = vsel %vm316, %v283, 0
      %v333 = vsel %vm316, %v284, 0
      %v336 = vsel %vm316, %v285, 0
      %v339 = vsel %vm316, %v286, 0
      %v342 = vsel %vm316, %v287, 0
      %v345 = vsel %vm316, %v288, 0
      %v348 = vsel %vm316, %v289, 0
      %v351 = vsel %vm316, %v290, 0
      %v354 = vsel %vm316, %v291, 0
      %v357 = vsel %vm316, %v292, 0
      %v360 = vsel %vm316, %v293, 0
      %v363 = vsel %vm316, %v294, 0
      %v366 = vsel %vm316, %v295, 0
      %v369 = vsel %vm316, %v296, 0
      %v372 = vsel %vm316, %v297, 0
      %v375 = vsel %vm316, %v298, 0
      %v378 = vsel %vm316, %v299, 0
      %v381 = vsel %vm316, %v300, 0
      %v384 = vsel %vm316, %v301, 0
      %v387 = vsel %vm316, %v302, 0
      %v390 = vsel %vm316, %v303, 0
      %v393 = vsel %vm316, %v304, 0
      %v396 = vsel %vm316, %v305, 0
      %v399 = vsel %vm316, %v306, 0
      %v402 = vsel %vm316, %v307, 0
      %v405 = vsel %vm316, %v308, 0
      %v408 = vsel %vm316, %v309, 0
      %v411 = vsel %vm316, %v310, 0
      %413 = vmatpush.msra.mxu0 0.0
      %414 = vmatpush.msra.mxu0 0.0
      %415 = vmatpush.msra.mxu0 0.0
      %416 = vmatpush.msra.mxu0 0.0
      %417 = vmatpush.msra.mxu0 0.0
      %418 = vmatpush.msra.mxu0 0.0
      %419 = vmatpush.msra.mxu0 0.0
      %420 = vmatpush.msra.mxu0 0.0
      %421 = vmatpush.msra.mxu0 0.0
      %422 = vmatpush.msra.mxu0 0.0
      %423 = vmatpush.msra.mxu0 0.0
      %424 = vmatpush.msra.mxu0 0.0
      %425 = vmatpush.msra.mxu0 0.0
      %426 = vmatpush.msra.mxu0 0.0
      %427 = vmatpush.msra.mxu0 0.0
      %428 = vmatpush.msra.mxu0 %v311
      %429 = vmatmul.f32.gmra.mxu0 %v318
      %v430 = vpop.f32.mrf.mxu0
      %v431 = vadd.f32 %v314, %v430
      %432 = vmatmul.f32.gmra.mxu0 %v321
      %v433 = vpop.f32.mrf.mxu0
      %v434 = vadd.f32 %v314, %v433
      %435 = vmatmul.f32.gmra.mxu0 %v324
      %v436 = vpop.f32.mrf.mxu0
      %v437 = vadd.f32 %v314, %v436
      %438 = vmatmul.f32.gmra.mxu0 %v327
      %v439 = vpop.f32.mrf.mxu0
      %v440 = vadd.f32 %v314, %v439
      %441 = vmatmul.f32.gmra.mxu0 %v330
      %v442 = vpop.f32.mrf.mxu0
      %v443 = vadd.f32 %v314, %v442
      %444 = vmatmul.f32.gmra.mxu0 %v333
      %v445 = vpop.f32.mrf.mxu0
      %v446 = vadd.f32 %v314, %v445
      %447 = vmatmul.f32.gmra.mxu0 %v336
      %v448 = vpop.f32.mrf.mxu0
      %v449 = vadd.f32 %v314, %v448
      %450 = vmatmul.f32.gmra.mxu0 %v339
      %v451 = vpop.f32.mrf.mxu0
      %v452 = vadd.f32 %v314, %v451
      %453 = vmatmul.f32.gmra.mxu0 %v342
      %v454 = vpop.f32.mrf.mxu0
      %v455 = vadd.f32 %v314, %v454
      %456 = vmatmul.f32.gmra.mxu0 %v345
      %v457 = vpop.f32.mrf.mxu0
      %v458 = vadd.f32 %v314, %v457
      %459 = vmatmul.f32.gmra.mxu0 %v348
      %v460 = vpop.f32.mrf.mxu0
      %v461 = vadd.f32 %v314, %v460
      %462 = vmatmul.f32.gmra.mxu0 %v351
      %v463 = vpop.f32.mrf.mxu0
      %v464 = vadd.f32 %v314, %v463
      %465 = vmatmul.f32.gmra.mxu0 %v354
      %v466 = vpop.f32.mrf.mxu0
      %v467 = vadd.f32 %v314, %v466
      %468 = vmatmul.f32.gmra.mxu0 %v357
      %v469 = vpop.f32.mrf.mxu0
      %v470 = vadd.f32 %v314, %v469
      %471 = vmatmul.f32.gmra.mxu0 %v360
      %v472 = vpop.f32.mrf.mxu0
      %v473 = vadd.f32 %v314, %v472
      %474 = vmatmul.f32.gmra.mxu0 %v363
      %v475 = vpop.f32.mrf.mxu0
      %v476 = vadd.f32 %v314, %v475
      %477 = vmatmul.f32.gmra.mxu0 %v366
      %v478 = vpop.f32.mrf.mxu0
      %v479 = vadd.f32 %v314, %v478
      %480 = vmatmul.f32.gmra.mxu0 %v369
      %v481 = vpop.f32.mrf.mxu0
      %v482 = vadd.f32 %v314, %v481
      %483 = vmatmul.f32.gmra.mxu0 %v372
      %v484 = vpop.f32.mrf.mxu0
      %v485 = vadd.f32 %v314, %v484
      %486 = vmatmul.f32.gmra.mxu0 %v375
      %v487 = vpop.f32.mrf.mxu0
      %v488 = vadd.f32 %v314, %v487
      %489 = vmatmul.f32.gmra.mxu0 %v378
      %v490 = vpop.f32.mrf.mxu0
      %v491 = vadd.f32 %v314, %v490
      %492 = vmatmul.f32.gmra.mxu0 %v381
      %v493 = vpop.f32.mrf.mxu0
      %v494 = vadd.f32 %v314, %v493
      %495 = vmatmul.f32.gmra.mxu0 %v384
      %v496 = vpop.f32.mrf.mxu0
      %v497 = vadd.f32 %v314, %v496
      %498 = vmatmul.f32.gmra.mxu0 %v387
      %v499 = vpop.f32.mrf.mxu0
      %v500 = vadd.f32 %v314, %v499
      %501 = vmatmul.f32.gmra.mxu0 %v390
      %v502 = vpop.f32.mrf.mxu0
      %v503 = vadd.f32 %v314, %v502
      %504 = vmatmul.f32.gmra.mxu0 %v393
      %v505 = vpop.f32.mrf.mxu0
      %v506 = vadd.f32 %v314, %v505
      %507 = vmatmul.f32.gmra.mxu0 %v396
      %v508 = vpop.f32.mrf.mxu0
      %v509 = vadd.f32 %v314, %v508
      %510 = vmatmul.f32.gmra.mxu0 %v399
      %v511 = vpop.f32.mrf.mxu0
      %v512 = vadd.f32 %v314, %v511
      %513 = vmatmul.f32.gmra.mxu0 %v402
      %v514 = vpop.f32.mrf.mxu0
      %v515 = vadd.f32 %v314, %v514
      %516 = vmatmul.f32.gmra.mxu0 %v405
      %v517 = vpop.f32.mrf.mxu0
      %v518 = vadd.f32 %v314, %v517
      %519 = vmatmul.f32.gmra.mxu0 %v408
      %v520 = vpop.f32.mrf.mxu0
      %v521 = vadd.f32 %v314, %v520
      %522 = vmatmul.f32.gmra.mxu0 %v411
      %v523 = vpop.f32.mrf.mxu0
      %v524 = vadd.f32 %v314, %v523
      %525 = vdwg.mxu0
      %v526 = vsub.f32 0.0, %v431
      %v527 = vsub.f32 0.0, %v434
      %v528 = vsub.f32 0.0, %v437
      %v529 = vsub.f32 0.0, %v440
      %v530 = vsub.f32 0.0, %v443
      %v531 = vsub.f32 0.0, %v446
      %v532 = vsub.f32 0.0, %v449
      %v533 = vsub.f32 0.0, %v452
      %v534 = vsub.f32 0.0, %v455
      %v535 = vsub.f32 0.0, %v458
      %v536 = vsub.f32 0.0, %v461
      %v537 = vsub.f32 0.0, %v464
      %v538 = vsub.f32 0.0, %v467
      %v539 = vsub.f32 0.0, %v470
      %v540 = vsub.f32 0.0, %v473
      %v541 = vsub.f32 0.0, %v476
      %v542 = vsub.f32 0.0, %v479
      %v543 = vsub.f32 0.0, %v482
      %v544 = vsub.f32 0.0, %v485
      %v545 = vsub.f32 0.0, %v488
      %v546 = vsub.f32 0.0, %v491
      %v547 = vsub.f32 0.0, %v494
      %v548 = vsub.f32 0.0, %v497
      %v549 = vsub.f32 0.0, %v500
      %v550 = vsub.f32 0.0, %v503
      %v551 = vsub.f32 0.0, %v506
      %v552 = vsub.f32 0.0, %v509
      %v553 = vsub.f32 0.0, %v512
      %v554 = vsub.f32 0.0, %v515
      %v555 = vsub.f32 0.0, %v518
      %v556 = vsub.f32 0.0, %v521
      %v557 = vsub.f32 0.0, %v524
      %v558 = vmul.f32 %v526, 1.442695
      %v559 = vpow.pop %v558
      %v560 = vmul.f32 %v527, 1.442695
      %v561 = vpow.pop %v560
      %v562 = vmul.f32 %v528, 1.442695
      %v563 = vpow.pop %v562
      %v564 = vmul.f32 %v529, 1.442695
      %v565 = vpow.pop %v564
      %v566 = vmul.f32 %v530, 1.442695
      %v567 = vpow.pop %v566
      %v568 = vmul.f32 %v531, 1.442695
      %v569 = vpow.pop %v568
      %v570 = vmul.f32 %v532, 1.442695
      %v571 = vpow.pop %v570
      %v572 = vmul.f32 %v533, 1.442695
      %v573 = vpow.pop %v572
      %v574 = vmul.f32 %v534, 1.442695
      %v575 = vpow.pop %v574
      %v576 = vmul.f32 %v535, 1.442695
      %v577 = vpow.pop %v576
      %v578 = vmul.f32 %v536, 1.442695
      %v579 = vpow.pop %v578
      %v580 = vmul.f32 %v537, 1.442695
      %v581 = vpow.pop %v580
      %v582 = vmul.f32 %v538, 1.442695
      %v583 = vpow.pop %v582
      %v584 = vmul.f32 %v539, 1.442695
      %v585 = vpow.pop %v584
      %v586 = vmul.f32 %v540, 1.442695
      %v587 = vpow.pop %v586
      %v588 = vmul.f32 %v541, 1.442695
      %v589 = vpow.pop %v588
      %v590 = vmul.f32 %v542, 1.442695
      %v591 = vpow.pop %v590
      %v592 = vmul.f32 %v543, 1.442695
      %v593 = vpow.pop %v592
      %v594 = vmul.f32 %v544, 1.442695
      %v595 = vpow.pop %v594
      %v596 = vmul.f32 %v545, 1.442695
      %v597 = vpow.pop %v596
      %v598 = vmul.f32 %v546, 1.442695
      %v599 = vpow.pop %v598
      %v600 = vmul.f32 %v547, 1.442695
      %v601 = vpow.pop %v600
      %v602 = vmul.f32 %v548, 1.442695
      %v603 = vpow.pop %v602
      %v604 = vmul.f32 %v549, 1.442695
      %v605 = vpow.pop %v604
      %v606 = vmul.f32 %v550, 1.442695
      %v607 = vpow.pop %v606
      %v608 = vmul.f32 %v551, 1.442695
      %v609 = vpow.pop %v608
      %v610 = vmul.f32 %v552, 1.442695
      %v611 = vpow.pop %v610
      %v612 = vmul.f32 %v553, 1.442695
      %v613 = vpow.pop %v612
      %v614 = vmul.f32 %v554, 1.442695
      %v615 = vpow.pop %v614
      %v616 = vmul.f32 %v555, 1.442695
      %v617 = vpow.pop %v616
      %v618 = vmul.f32 %v556, 1.442695
      %v619 = vpow.pop %v618
      %v620 = vmul.f32 %v557, 1.442695
      %v621 = vpow.pop %v620
      %v622 = vadd.f32 %v559, 1.0
      %v623 = vadd.f32 %v561, 1.0
      %v624 = vadd.f32 %v563, 1.0
      %v625 = vadd.f32 %v565, 1.0
      %v626 = vadd.f32 %v567, 1.0
      %v627 = vadd.f32 %v569, 1.0
      %v628 = vadd.f32 %v571, 1.0
      %v629 = vadd.f32 %v573, 1.0
      %v630 = vadd.f32 %v575, 1.0
      %v631 = vadd.f32 %v577, 1.0
      %v632 = vadd.f32 %v579, 1.0
      %v633 = vadd.f32 %v581, 1.0
      %v634 = vadd.f32 %v583, 1.0
      %v635 = vadd.f32 %v585, 1.0
      %v636 = vadd.f32 %v587, 1.0
      %v637 = vadd.f32 %v589, 1.0
      %v638 = vadd.f32 %v591, 1.0
      %v639 = vadd.f32 %v593, 1.0
      %v640 = vadd.f32 %v595, 1.0
      %v641 = vadd.f32 %v597, 1.0
      %v642 = vadd.f32 %v599, 1.0
      %v643 = vadd.f32 %v601, 1.0
      %v644 = vadd.f32 %v603, 1.0
      %v645 = vadd.f32 %v605, 1.0
      %v646 = vadd.f32 %v607, 1.0
      %v647 = vadd.f32 %v609, 1.0
      %v648 = vadd.f32 %v611, 1.0
      %v649 = vadd.f32 %v613, 1.0
      %v650 = vadd.f32 %v615, 1.0
      %v651 = vadd.f32 %v617, 1.0
      %v652 = vadd.f32 %v619, 1.0
      %v653 = vadd.f32 %v621, 1.0
      %v654 = vrcp.pop %v622
      %v655 = vrcp.pop %v623
      %v656 = vrcp.pop %v624
      %v657 = vrcp.pop %v625
      %v658 = vrcp.pop %v626
      %v659 = vrcp.pop %v627
      %v660 = vrcp.pop %v628
      %v661 = vrcp.pop %v629
      %v662 = vrcp.pop %v630
      %v663 = vrcp.pop %v631
      %v664 = vrcp.pop %v632
      %v665 = vrcp.pop %v633
      %v666 = vrcp.pop %v634
      %v667 = vrcp.pop %v635
      %v668 = vrcp.pop %v636
      %v669 = vrcp.pop %v637
      %v670 = vrcp.pop %v638
      %v671 = vrcp.pop %v639
      %v672 = vrcp.pop %v640
      %v673 = vrcp.pop %v641
      %v674 = vrcp.pop %v642
      %v675 = vrcp.pop %v643
      %v676 = vrcp.pop %v644
      %v677 = vrcp.pop %v645
      %v678 = vrcp.pop %v646
      %v679 = vrcp.pop %v647
      %v680 = vrcp.pop %v648
      %v681 = vrcp.pop %v649
      %v682 = vrcp.pop %v650
      %v683 = vrcp.pop %v651
      %v684 = vrcp.pop %v652
      %v685 = vrcp.pop %v653
      %v686 = vmul.f32 %v431, %v654
      %v687 = vmul.f32 %v434, %v655
      %v688 = vmul.f32 %v437, %v656
      %v689 = vmul.f32 %v440, %v657
      %v690 = vmul.f32 %v443, %v658
      %v691 = vmul.f32 %v446, %v659
      %v692 = vmul.f32 %v449, %v660
      %v693 = vmul.f32 %v452, %v661
      %v694 = vmul.f32 %v455, %v662
      %v695 = vmul.f32 %v458, %v663
      %v696 = vmul.f32 %v461, %v664
      %v697 = vmul.f32 %v464, %v665
      %v698 = vmul.f32 %v467, %v666
      %v699 = vmul.f32 %v470, %v667
      %v700 = vmul.f32 %v473, %v668
      %v701 = vmul.f32 %v476, %v669
      %v702 = vmul.f32 %v479, %v670
      %v703 = vmul.f32 %v482, %v671
      %v704 = vmul.f32 %v485, %v672
      %v705 = vmul.f32 %v488, %v673
      %v706 = vmul.f32 %v491, %v674
      %v707 = vmul.f32 %v494, %v675
      %v708 = vmul.f32 %v497, %v676
      %v709 = vmul.f32 %v500, %v677
      %v710 = vmul.f32 %v503, %v678
      %v711 = vmul.f32 %v506, %v679
      %v712 = vmul.f32 %v509, %v680
      %v713 = vmul.f32 %v512, %v681
      %v714 = vmul.f32 %v515, %v682
      %v715 = vmul.f32 %v518, %v683
      %v716 = vmul.f32 %v521, %v684
      %v717 = vmul.f32 %v524, %v685
      %718 = vst [vmem:[#allocation2] sm:$0xff] %v686
      %719 = vst [vmem:[#allocation2 + $0x8] sm:$0xff] %v687
      %720 = vst [vmem:[#allocation2 + $0x10] sm:$0xff] %v688
      %721 = vst [vmem:[#allocation2 + $0x18] sm:$0xff] %v689
      %722 = vst [vmem:[#allocation2 + $0x20] sm:$0xff] %v690
      %723 = vst [vmem:[#allocation2 + $0x28] sm:$0xff] %v691
      %724 = vst [vmem:[#allocation2 + $0x30] sm:$0xff] %v692
      %725 = vst [vmem:[#allocation2 + $0x38] sm:$0xff] %v693
      %726 = vst [vmem:[#allocation2 + $0x40] sm:$0xff] %v694
      %727 = vst [vmem:[#allocation2 + $0x48] sm:$0xff] %v695
      %728 = vst [vmem:[#allocation2 + $0x50] sm:$0xff] %v696
      %729 = vst [vmem:[#allocation2 + $0x58] sm:$0xff] %v697
      %730 = vst [vmem:[#allocation2 + $0x60] sm:$0xff] %v698
      %731 = vst [vmem:[#allocation2 + $0x68] sm:$0xff] %v699
      %732 = vst [vmem:[#allocation2 + $0x70] sm:$0xff] %v700
      %733 = vst [vmem:[#allocation2 + $0x78] sm:$0xff] %v701
      %734 = vst [vmem:[#allocation2 + $0x80] sm:$0xff] %v702
      %735 = vst [vmem:[#allocation2 + $0x88] sm:$0xff] %v703
      %736 = vst [vmem:[#allocation2 + $0x90] sm:$0xff] %v704
      %737 = vst [vmem:[#allocation2 + $0x98] sm:$0xff] %v705
      %738 = vst [vmem:[#allocation2 + $0xa0] sm:$0xff] %v706
      %739 = vst [vmem:[#allocation2 + $0xa8] sm:$0xff] %v707
      %740 = vst [vmem:[#allocation2 + $0xb0] sm:$0xff] %v708
      %741 = vst [vmem:[#allocation2 + $0xb8] sm:$0xff] %v709
      %742 = vst [vmem:[#allocation2 + $0xc0] sm:$0xff] %v710
      %743 = vst [vmem:[#allocation2 + $0xc8] sm:$0xff] %v711
      %744 = vst [vmem:[#allocation2 + $0xd0] sm:$0xff] %v712
      %745 = vst [vmem:[#allocation2 + $0xd8] sm:$0xff] %v713
      %746 = vst [vmem:[#allocation2 + $0xe0] sm:$0xff] %v714
      %747 = vst [vmem:[#allocation2 + $0xe8] sm:$0xff] %v715
      %748 = vst [vmem:[#allocation2 + $0xf0] sm:$0xff] %v716
      %749 = vst [vmem:[#allocation2 + $0xf8] sm:$0xff] %v717
      %v750 = vld [vmem:[#allocation2] sm:$0xff]
      %v751 = vld [vmem:[#allocation2 + $0x8] sm:$0xff]
      %v752 = vld [vmem:[#allocation2 + $0x10] sm:$0xff]
      %v753 = vld [vmem:[#allocation2 + $0x18] sm:$0xff]
      %v754 = vld [vmem:[#allocation2 + $0x20] sm:$0xff]
      %v755 = vld [vmem:[#allocation2 + $0x28] sm:$0xff]
      %v756 = vld [vmem:[#allocation2 + $0x30] sm:$0xff]
      %v757 = vld [vmem:[#allocation2 + $0x38] sm:$0xff]
      %v758 = vld [vmem:[#allocation2 + $0x40] sm:$0xff]
      %v759 = vld [vmem:[#allocation2 + $0x48] sm:$0xff]
      %v760 = vld [vmem:[#allocation2 + $0x50] sm:$0xff]
      %v761 = vld [vmem:[#allocation2 + $0x58] sm:$0xff]
      %v762 = vld [vmem:[#allocation2 + $0x60] sm:$0xff]
      %v763 = vld [vmem:[#allocation2 + $0x68] sm:$0xff]
      %v764 = vld [vmem:[#allocation2 + $0x70] sm:$0xff]
      %v765 = vld [vmem:[#allocation2 + $0x78] sm:$0xff]
      %v766 = vld [vmem:[#allocation2 + $0x80] sm:$0xff]
      %v767 = vld [vmem:[#allocation2 + $0x88] sm:$0xff]
      %v768 = vld [vmem:[#allocation2 + $0x90] sm:$0xff]
      %v769 = vld [vmem:[#allocation2 + $0x98] sm:$0xff]
      %v770 = vld [vmem:[#allocation2 + $0xa0] sm:$0xff]
      %v771 = vld [vmem:[#allocation2 + $0xa8] sm:$0xff]
      %v772 = vld [vmem:[#allocation2 + $0xb0] sm:$0xff]
      %v773 = vld [vmem:[#allocation2 + $0xb8] sm:$0xff]
      %v774 = vld [vmem:[#allocation2 + $0xc0] sm:$0xff]
      %v775 = vld [vmem:[#allocation2 + $0xc8] sm:$0xff]
      %v776 = vld [vmem:[#allocation2 + $0xd0] sm:$0xff]
      %v777 = vld [vmem:[#allocation2 + $0xd8] sm:$0xff]
      %v778 = vld [vmem:[#allocation2 + $0xe0] sm:$0xff]
      %v779 = vld [vmem:[#allocation2 + $0xe8] sm:$0xff]
      %v780 = vld [vmem:[#allocation2 + $0xf0] sm:$0xff]
      %v781 = vld [vmem:[#allocation2 + $0xf8] sm:$0xff]
      %v782 = vld [vmem:[%s3] sm:$0xf]
      %v783 = vperm.slane %v782, 0
      %v784 = vmul.f32 %v750, %v783
      %v785 = vmul.f32 %v751, %v783
      %v786 = vmul.f32 %v752, %v783
      %v787 = vmul.f32 %v753, %v783
      %v788 = vmul.f32 %v754, %v783
      %v789 = vmul.f32 %v755, %v783
      %v790 = vmul.f32 %v756, %v783
      %v791 = vmul.f32 %v757, %v783
      %v792 = vmul.f32 %v758, %v783
      %v793 = vmul.f32 %v759, %v783
      %v794 = vmul.f32 %v760, %v783
      %v795 = vmul.f32 %v761, %v783
      %v796 = vmul.f32 %v762, %v783
      %v797 = vmul.f32 %v763, %v783
      %v798 = vmul.f32 %v764, %v783
      %v799 = vmul.f32 %v765, %v783
      %v800 = vmul.f32 %v766, %v783
      %v801 = vmul.f32 %v767, %v783
      %v802 = vmul.f32 %v768, %v783
      %v803 = vmul.f32 %v769, %v783
      %v804 = vmul.f32 %v770, %v783
      %v805 = vmul.f32 %v771, %v783
      %v806 = vmul.f32 %v772, %v783
      %v807 = vmul.f32 %v773, %v783
      %v808 = vmul.f32 %v774, %v783
      %v809 = vmul.f32 %v775, %v783
      %v810 = vmul.f32 %v776, %v783
      %v811 = vmul.f32 %v777, %v783
      %v812 = vmul.f32 %v778, %v783
      %v813 = vmul.f32 %v779, %v783
      %v814 = vperm.slane %v782, 2
      %v815 = vmul.f32 %v752, %v814
      %v816 = vmul.f32 %v753, %v814
      %v817 = vmul.f32 %v754, %v814
      %v818 = vmul.f32 %v755, %v814
      %v819 = vmul.f32 %v756, %v814
      %v820 = vmul.f32 %v757, %v814
      %v821 = vmul.f32 %v758, %v814
      %v822 = vmul.f32 %v759, %v814
      %v823 = vmul.f32 %v760, %v814
      %v824 = vmul.f32 %v761, %v814
      %v825 = vmul.f32 %v762, %v814
      %v826 = vmul.f32 %v763, %v814
      %v827 = vmul.f32 %v764, %v814
      %v828 = vmul.f32 %v765, %v814
      %v829 = vmul.f32 %v766, %v814
      %v830 = vmul.f32 %v767, %v814
      %v831 = vmul.f32 %v768, %v814
      %v832 = vmul.f32 %v769, %v814
      %v833 = vmul.f32 %v770, %v814
      %v834 = vmul.f32 %v771, %v814
      %v835 = vmul.f32 %v772, %v814
      %v836 = vmul.f32 %v773, %v814
      %v837 = vmul.f32 %v774, %v814
      %v838 = vmul.f32 %v775, %v814
      %v839 = vmul.f32 %v776, %v814
      %v840 = vmul.f32 %v777, %v814
      %v841 = vmul.f32 %v778, %v814
      %v842 = vmul.f32 %v779, %v814
      %v843 = vmul.f32 %v780, %v814
      %v844 = vmul.f32 %v781, %v814
      %v845 = vadd.f32 %v784, %v815
      %v846 = vadd.f32 %v785, %v816
      %v847 = vadd.f32 %v786, %v817
      %v848 = vadd.f32 %v787, %v818
      %v849 = vadd.f32 %v788, %v819
      %v850 = vadd.f32 %v789, %v820
      %v851 = vadd.f32 %v790, %v821
      %v852 = vadd.f32 %v791, %v822
      %v853 = vadd.f32 %v792, %v823
      %v854 = vadd.f32 %v793, %v824
      %v855 = vadd.f32 %v794, %v825
      %v856 = vadd.f32 %v795, %v826
      %v857 = vadd.f32 %v796, %v827
      %v858 = vadd.f32 %v797, %v828
      %v859 = vadd.f32 %v798, %v829
      %v860 = vadd.f32 %v799, %v830
      %v861 = vadd.f32 %v800, %v831
      %v862 = vadd.f32 %v801, %v832
      %v863 = vadd.f32 %v802, %v833
      %v864 = vadd.f32 %v803, %v834
      %v865 = vadd.f32 %v804, %v835
      %v866 = vadd.f32 %v805, %v836
      %v867 = vadd.f32 %v806, %v837
      %v868 = vadd.f32 %v807, %v838
      %v869 = vadd.f32 %v808, %v839
      %v870 = vadd.f32 %v809, %v840
      %v871 = vadd.f32 %v810, %v841
      %v872 = vadd.f32 %v811, %v842
      %v873 = vadd.f32 %v812, %v843
      %v874 = vadd.f32 %v813, %v844
      %v875 = vrot.slane %v750, 1
      %v876 = vrot.slane %v752, 1
      %v877 = vrot.slane %v754, 1
      %v878 = vrot.slane %v756, 1
      %v879 = vrot.slane %v758, 1
      %v880 = vrot.slane %v760, 1
      %v881 = vrot.slane %v762, 1
      %v882 = vrot.slane %v764, 1
      %v883 = vrot.slane %v766, 1
      %v884 = vrot.slane %v768, 1
      %v885 = vrot.slane %v770, 1
      %v886 = vrot.slane %v772, 1
      %v887 = vrot.slane %v774, 1
      %v888 = vrot.slane %v776, 1
      %v889 = vrot.slane %v778, 1
      %v890 = vrot.slane %v780, 1
      %v891 = vrot.slane %v751, 1
      %v892 = vrot.slane %v753, 1
      %v893 = vrot.slane %v755, 1
      %v894 = vrot.slane %v757, 1
      %v895 = vrot.slane %v759, 1
      %v896 = vrot.slane %v761, 1
      %v897 = vrot.slane %v763, 1
      %v898 = vrot.slane %v765, 1
      %v899 = vrot.slane %v767, 1
      %v900 = vrot.slane %v769, 1
      %v901 = vrot.slane %v771, 1
      %v902 = vrot.slane %v773, 1
      %v903 = vrot.slane %v775, 1
      %v904 = vrot.slane %v777, 1
      %v905 = vrot.slane %v779, 1
      %v906 = vrot.slane %v781, 1
      %v907 = vlaneseq
      %v908 = vshrl.u32 %v907, 7
      %vm909 = vcmp.lt.s32.totalorder %v908, 7
      %v910 = vsel %vm909, %v875, %v891
      %v911 = vsel %vm909, %v876, %v892
      %v912 = vsel %vm909, %v877, %v893
      %v913 = vsel %vm909, %v878, %v894
      %v914 = vsel %vm909, %v879, %v895
      %v915 = vsel %vm909, %v880, %v896
      %v916 = vsel %vm909, %v881, %v897
      %v917 = vsel %vm909, %v882, %v898
      %v918 = vsel %vm909, %v883, %v899
      %v919 = vsel %vm909, %v884, %v900
      %v920 = vsel %vm909, %v885, %v901
      %v921 = vsel %vm909, %v886, %v902
      %v922 = vsel %vm909, %v887, %v903
      %v923 = vsel %vm909, %v888, %v904
      %v924 = vsel %vm909, %v889, %v905
      %v925 = vsel %vm909, %v890, %v906
      %v926 = vsel %vm909, %v891, %v875
      %v927 = vsel %vm909, %v892, %v876
      %v928 = vsel %vm909, %v893, %v877
      %v929 = vsel %vm909, %v894, %v878
      %v930 = vsel %vm909, %v895, %v879
      %v931 = vsel %vm909, %v896, %v880
      %v932 = vsel %vm909, %v897, %v881
      %v933 = vsel %vm909, %v898, %v882
      %v934 = vsel %vm909, %v899, %v883
      %v935 = vsel %vm909, %v900, %v884
      %v936 = vsel %vm909, %v901, %v885
      %v937 = vsel %vm909, %v902, %v886
      %v938 = vsel %vm909, %v903, %v887
      %v939 = vsel %vm909, %v904, %v888
      %v940 = vsel %vm909, %v905, %v889
      %v941 = vsel %vm909, %v906, %v890
      %v942 = vperm.slane %v782, 1
      %v943 = vmul.f32 %v910, %v942
      %v944 = vmul.f32 %v926, %v942
      %v945 = vmul.f32 %v911, %v942
      %v946 = vmul.f32 %v927, %v942
      %v947 = vmul.f32 %v912, %v942
      %v948 = vmul.f32 %v928, %v942
      %v949 = vmul.f32 %v913, %v942
      %v950 = vmul.f32 %v929, %v942
      %v951 = vmul.f32 %v914, %v942
      %v952 = vmul.f32 %v930, %v942
      %v953 = vmul.f32 %v915, %v942
      %v954 = vmul.f32 %v931, %v942
      %v955 = vmul.f32 %v916, %v942
      %v956 = vmul.f32 %v932, %v942
      %v957 = vmul.f32 %v917, %v942
      %v958 = vmul.f32 %v933, %v942
      %v959 = vmul.f32 %v918, %v942
      %v960 = vmul.f32 %v934, %v942
      %v961 = vmul.f32 %v919, %v942
      %v962 = vmul.f32 %v935, %v942
      %v963 = vmul.f32 %v920, %v942
      %v964 = vmul.f32 %v936, %v942
      %v965 = vmul.f32 %v921, %v942
      %v966 = vmul.f32 %v937, %v942
      %v967 = vmul.f32 %v922, %v942
      %v968 = vmul.f32 %v938, %v942
      %v969 = vmul.f32 %v923, %v942
      %v970 = vmul.f32 %v939, %v942
      %v971 = vmul.f32 %v924, %v942
      %v972 = vmul.f32 %v940, %v942
      %v973 = vadd.f32 %v845, %v943
      %v974 = vadd.f32 %v846, %v944
      %v975 = vadd.f32 %v847, %v945
      %v976 = vadd.f32 %v848, %v946
      %v977 = vadd.f32 %v849, %v947
      %v978 = vadd.f32 %v850, %v948
      %v979 = vadd.f32 %v851, %v949
      %v980 = vadd.f32 %v852, %v950
      %v981 = vadd.f32 %v853, %v951
      %v982 = vadd.f32 %v854, %v952
      %v983 = vadd.f32 %v855, %v953
      %v984 = vadd.f32 %v856, %v954
      %v985 = vadd.f32 %v857, %v955
      %v986 = vadd.f32 %v858, %v956
      %v987 = vadd.f32 %v859, %v957
      %v988 = vadd.f32 %v860, %v958
      %v989 = vadd.f32 %v861, %v959
      %v990 = vadd.f32 %v862, %v960
      %v991 = vadd.f32 %v863, %v961
      %v992 = vadd.f32 %v864, %v962
      %v993 = vadd.f32 %v865, %v963
      %v994 = vadd.f32 %v866, %v964
      %v995 = vadd.f32 %v867, %v965
      %v996 = vadd.f32 %v868, %v966
      %v997 = vadd.f32 %v869, %v967
      %v998 = vadd.f32 %v870, %v968
      %v999 = vadd.f32 %v871, %v969
      %v1000 = vadd.f32 %v872, %v970
      %v1001 = vadd.f32 %v873, %v971
      %v1002 = vadd.f32 %v874, %v972
      %v1003 = vperm.slane %v782, 3
      %v1004 = vmul.f32 %v911, %v1003
      %v1005 = vmul.f32 %v927, %v1003
      %v1006 = vmul.f32 %v912, %v1003
      %v1007 = vmul.f32 %v928, %v1003
      %v1008 = vmul.f32 %v913, %v1003
      %v1009 = vmul.f32 %v929, %v1003
      %v1010 = vmul.f32 %v914, %v1003
      %v1011 = vmul.f32 %v930, %v1003
      %v1012 = vmul.f32 %v915, %v1003
      %v1013 = vmul.f32 %v931, %v1003
      %v1014 = vmul.f32 %v916, %v1003
      %v1015 = vmul.f32 %v932, %v1003
      %v1016 = vmul.f32 %v917, %v1003
      %v1017 = vmul.f32 %v933, %v1003
      %v1018 = vmul.f32 %v918, %v1003
      %v1019 = vmul.f32 %v934, %v1003
      %v1020 = vmul.f32 %v919, %v1003
      %v1021 = vmul.f32 %v935, %v1003
      %v1022 = vmul.f32 %v920, %v1003
      %v1023 = vmul.f32 %v936, %v1003
      %v1024 = vmul.f32 %v921, %v1003
      %v1025 = vmul.f32 %v937, %v1003
      %v1026 = vmul.f32 %v922, %v1003
      %v1027 = vmul.f32 %v938, %v1003
      %v1028 = vmul.f32 %v923, %v1003
      %v1029 = vmul.f32 %v939, %v1003
      %v1030 = vmul.f32 %v924, %v1003
      %v1031 = vmul.f32 %v940, %v1003
      %v1032 = vmul.f32 %v925, %v1003
      %v1033 = vmul.f32 %v941, %v1003
      %v1034 = vadd.f32 %v973, %v1004
      %v1035 = vadd.f32 %v974, %v1005
      %v1036 = vadd.f32 %v975, %v1006
      %v1037 = vadd.f32 %v976, %v1007
      %v1038 = vadd.f32 %v977, %v1008
      %v1039 = vadd.f32 %v978, %v1009
      %v1040 = vadd.f32 %v979, %v1010
      %v1041 = vadd.f32 %v980, %v1011
      %v1042 = vadd.f32 %v981, %v1012
      %v1043 = vadd.f32 %v982, %v1013
      %v1044 = vadd.f32 %v983, %v1014
      %v1045 = vadd.f32 %v984, %v1015
      %v1046 = vadd.f32 %v985, %v1016
      %v1047 = vadd.f32 %v986, %v1017
      %v1048 = vadd.f32 %v987, %v1018
      %v1049 = vadd.f32 %v988, %v1019
      %v1050 = vadd.f32 %v989, %v1020
      %v1051 = vadd.f32 %v990, %v1021
      %v1052 = vadd.f32 %v991, %v1022
      %v1053 = vadd.f32 %v992, %v1023
      %v1054 = vadd.f32 %v993, %v1024
      %v1055 = vadd.f32 %v994, %v1025
      %v1056 = vadd.f32 %v995, %v1026
      %v1057 = vadd.f32 %v996, %v1027
      %v1058 = vadd.f32 %v997, %v1028
      %v1059 = vadd.f32 %v998, %v1029
      %v1060 = vadd.f32 %v999, %v1030
      %v1061 = vadd.f32 %v1000, %v1031
      %v1062 = vadd.f32 %v1001, %v1032
      %v1063 = vadd.f32 %v1002, %v1033
      %v1064 = vld [vmem:[%s4] sm:$0x1]
      %v1066 = vperm.slane %v1064, 0
      %v1068 = vadd.f32 %v1034, %v1066
      %v1069 = vadd.f32 %v1035, %v1066
      %v1070 = vadd.f32 %v1036, %v1066
      %v1071 = vadd.f32 %v1037, %v1066
      %v1072 = vadd.f32 %v1038, %v1066
      %v1073 = vadd.f32 %v1039, %v1066
      %v1074 = vadd.f32 %v1040, %v1066
      %v1075 = vadd.f32 %v1041, %v1066
      %v1076 = vadd.f32 %v1042, %v1066
      %v1077 = vadd.f32 %v1043, %v1066
      %v1078 = vadd.f32 %v1044, %v1066
      %v1079 = vadd.f32 %v1045, %v1066
      %v1080 = vadd.f32 %v1046, %v1066
      %v1081 = vadd.f32 %v1047, %v1066
      %v1082 = vadd.f32 %v1048, %v1066
      %v1083 = vadd.f32 %v1049, %v1066
      %v1084 = vadd.f32 %v1050, %v1066
      %v1085 = vadd.f32 %v1051, %v1066
      %v1086 = vadd.f32 %v1052, %v1066
      %v1087 = vadd.f32 %v1053, %v1066
      %v1088 = vadd.f32 %v1054, %v1066
      %v1089 = vadd.f32 %v1055, %v1066
      %v1090 = vadd.f32 %v1056, %v1066
      %v1091 = vadd.f32 %v1057, %v1066
      %v1092 = vadd.f32 %v1058, %v1066
      %v1093 = vadd.f32 %v1059, %v1066
      %v1094 = vadd.f32 %v1060, %v1066
      %v1095 = vadd.f32 %v1061, %v1066
      %v1096 = vadd.f32 %v1062, %v1066
      %v1097 = vadd.f32 %v1063, %v1066
      %v1098 = vsub.f32 0.0, %v1068
      %v1099 = vsub.f32 0.0, %v1069
      %v1100 = vsub.f32 0.0, %v1070
      %v1101 = vsub.f32 0.0, %v1071
      %v1102 = vsub.f32 0.0, %v1072
      %v1103 = vsub.f32 0.0, %v1073
      %v1104 = vsub.f32 0.0, %v1074
      %v1105 = vsub.f32 0.0, %v1075
      %v1106 = vsub.f32 0.0, %v1076
      %v1107 = vsub.f32 0.0, %v1077
      %v1108 = vsub.f32 0.0, %v1078
      %v1109 = vsub.f32 0.0, %v1079
      %v1110 = vsub.f32 0.0, %v1080
      %v1111 = vsub.f32 0.0, %v1081
      %v1112 = vsub.f32 0.0, %v1082
      %v1113 = vsub.f32 0.0, %v1083
      %v1114 = vsub.f32 0.0, %v1084
      %v1115 = vsub.f32 0.0, %v1085
      %v1116 = vsub.f32 0.0, %v1086
      %v1117 = vsub.f32 0.0, %v1087
      %v1118 = vsub.f32 0.0, %v1088
      %v1119 = vsub.f32 0.0, %v1089
      %v1120 = vsub.f32 0.0, %v1090
      %v1121 = vsub.f32 0.0, %v1091
      %v1122 = vsub.f32 0.0, %v1092
      %v1123 = vsub.f32 0.0, %v1093
      %v1124 = vsub.f32 0.0, %v1094
      %v1125 = vsub.f32 0.0, %v1095
      %v1126 = vsub.f32 0.0, %v1096
      %v1127 = vsub.f32 0.0, %v1097
      %v1128 = vmul.f32 %v1098, 1.442695
      %v1129 = vpow.pop %v1128
      %v1130 = vmul.f32 %v1099, 1.442695
      %v1131 = vpow.pop %v1130
      %v1132 = vmul.f32 %v1100, 1.442695
      %v1133 = vpow.pop %v1132
      %v1134 = vmul.f32 %v1101, 1.442695
      %v1135 = vpow.pop %v1134
      %v1136 = vmul.f32 %v1102, 1.442695
      %v1137 = vpow.pop %v1136
      %v1138 = vmul.f32 %v1103, 1.442695
      %v1139 = vpow.pop %v1138
      %v1140 = vmul.f32 %v1104, 1.442695
      %v1141 = vpow.pop %v1140
      %v1142 = vmul.f32 %v1105, 1.442695
      %v1143 = vpow.pop %v1142
      %v1144 = vmul.f32 %v1106, 1.442695
      %v1145 = vpow.pop %v1144
      %v1146 = vmul.f32 %v1107, 1.442695
      %v1147 = vpow.pop %v1146
      %v1148 = vmul.f32 %v1108, 1.442695
      %v1149 = vpow.pop %v1148
      %v1150 = vmul.f32 %v1109, 1.442695
      %v1151 = vpow.pop %v1150
      %v1152 = vmul.f32 %v1110, 1.442695
      %v1153 = vpow.pop %v1152
      %v1154 = vmul.f32 %v1111, 1.442695
      %v1155 = vpow.pop %v1154
      %v1156 = vmul.f32 %v1112, 1.442695
      %v1157 = vpow.pop %v1156
      %v1158 = vmul.f32 %v1113, 1.442695
      %v1159 = vpow.pop %v1158
      %v1160 = vmul.f32 %v1114, 1.442695
      %v1161 = vpow.pop %v1160
      %v1162 = vmul.f32 %v1115, 1.442695
      %v1163 = vpow.pop %v1162
      %v1164 = vmul.f32 %v1116, 1.442695
      %v1165 = vpow.pop %v1164
      %v1166 = vmul.f32 %v1117, 1.442695
      %v1167 = vpow.pop %v1166
      %v1168 = vmul.f32 %v1118, 1.442695
      %v1169 = vpow.pop %v1168
      %v1170 = vmul.f32 %v1119, 1.442695
      %v1171 = vpow.pop %v1170
      %v1172 = vmul.f32 %v1120, 1.442695
      %v1173 = vpow.pop %v1172
      %v1174 = vmul.f32 %v1121, 1.442695
      %v1175 = vpow.pop %v1174
      %v1176 = vmul.f32 %v1122, 1.442695
      %v1177 = vpow.pop %v1176
      %v1178 = vmul.f32 %v1123, 1.442695
      %v1179 = vpow.pop %v1178
      %v1180 = vmul.f32 %v1124, 1.442695
      %v1181 = vpow.pop %v1180
      %v1182 = vmul.f32 %v1125, 1.442695
      %v1183 = vpow.pop %v1182
      %v1184 = vmul.f32 %v1126, 1.442695
      %v1185 = vpow.pop %v1184
      %v1186 = vmul.f32 %v1127, 1.442695
      %v1187 = vpow.pop %v1186
      %v1188 = vadd.f32 %v1129, 1.0
      %v1189 = vadd.f32 %v1131, 1.0
      %v1190 = vadd.f32 %v1133, 1.0
      %v1191 = vadd.f32 %v1135, 1.0
      %v1192 = vadd.f32 %v1137, 1.0
      %v1193 = vadd.f32 %v1139, 1.0
      %v1194 = vadd.f32 %v1141, 1.0
      %v1195 = vadd.f32 %v1143, 1.0
      %v1196 = vadd.f32 %v1145, 1.0
      %v1197 = vadd.f32 %v1147, 1.0
      %v1198 = vadd.f32 %v1149, 1.0
      %v1199 = vadd.f32 %v1151, 1.0
      %v1200 = vadd.f32 %v1153, 1.0
      %v1201 = vadd.f32 %v1155, 1.0
      %v1202 = vadd.f32 %v1157, 1.0
      %v1203 = vadd.f32 %v1159, 1.0
      %v1204 = vadd.f32 %v1161, 1.0
      %v1205 = vadd.f32 %v1163, 1.0
      %v1206 = vadd.f32 %v1165, 1.0
      %v1207 = vadd.f32 %v1167, 1.0
      %v1208 = vadd.f32 %v1169, 1.0
      %v1209 = vadd.f32 %v1171, 1.0
      %v1210 = vadd.f32 %v1173, 1.0
      %v1211 = vadd.f32 %v1175, 1.0
      %v1212 = vadd.f32 %v1177, 1.0
      %v1213 = vadd.f32 %v1179, 1.0
      %v1214 = vadd.f32 %v1181, 1.0
      %v1215 = vadd.f32 %v1183, 1.0
      %v1216 = vadd.f32 %v1185, 1.0
      %v1217 = vadd.f32 %v1187, 1.0
      %v1218 = vrcp.pop %v1188
      %v1219 = vrcp.pop %v1189
      %v1220 = vrcp.pop %v1190
      %v1221 = vrcp.pop %v1191
      %v1222 = vrcp.pop %v1192
      %v1223 = vrcp.pop %v1193
      %v1224 = vrcp.pop %v1194
      %v1225 = vrcp.pop %v1195
      %v1226 = vrcp.pop %v1196
      %v1227 = vrcp.pop %v1197
      %v1228 = vrcp.pop %v1198
      %v1229 = vrcp.pop %v1199
      %v1230 = vrcp.pop %v1200
      %v1231 = vrcp.pop %v1201
      %v1232 = vrcp.pop %v1202
      %v1233 = vrcp.pop %v1203
      %v1234 = vrcp.pop %v1204
      %v1235 = vrcp.pop %v1205
      %v1236 = vrcp.pop %v1206
      %v1237 = vrcp.pop %v1207
      %v1238 = vrcp.pop %v1208
      %v1239 = vrcp.pop %v1209
      %v1240 = vrcp.pop %v1210
      %v1241 = vrcp.pop %v1211
      %v1242 = vrcp.pop %v1212
      %v1243 = vrcp.pop %v1213
      %v1244 = vrcp.pop %v1214
      %v1245 = vrcp.pop %v1215
      %v1246 = vrcp.pop %v1216
      %v1247 = vrcp.pop %v1217
      %v1248 = vmul.f32 %v1068, %v1218
      %v1249 = vmul.f32 %v1069, %v1219
      %v1250 = vmul.f32 %v1070, %v1220
      %v1251 = vmul.f32 %v1071, %v1221
      %v1252 = vmul.f32 %v1072, %v1222
      %v1253 = vmul.f32 %v1073, %v1223
      %v1254 = vmul.f32 %v1074, %v1224
      %v1255 = vmul.f32 %v1075, %v1225
      %v1256 = vmul.f32 %v1076, %v1226
      %v1257 = vmul.f32 %v1077, %v1227
      %v1258 = vmul.f32 %v1078, %v1228
      %v1259 = vmul.f32 %v1079, %v1229
      %v1260 = vmul.f32 %v1080, %v1230
      %v1261 = vmul.f32 %v1081, %v1231
      %v1262 = vmul.f32 %v1082, %v1232
      %v1263 = vmul.f32 %v1083, %v1233
      %v1264 = vmul.f32 %v1084, %v1234
      %v1265 = vmul.f32 %v1085, %v1235
      %v1266 = vmul.f32 %v1086, %v1236
      %v1267 = vmul.f32 %v1087, %v1237
      %v1268 = vmul.f32 %v1088, %v1238
      %v1269 = vmul.f32 %v1089, %v1239
      %v1270 = vmul.f32 %v1090, %v1240
      %v1271 = vmul.f32 %v1091, %v1241
      %v1272 = vmul.f32 %v1092, %v1242
      %v1273 = vmul.f32 %v1093, %v1243
      %v1274 = vmul.f32 %v1094, %v1244
      %v1275 = vmul.f32 %v1095, %v1245
      %v1276 = vmul.f32 %v1096, %v1246
      %v1277 = vmul.f32 %v1097, %v1247
      %v1278 = vld [vmem:[%s5] sm:$0xff]
      %v1279 = vld [vmem:[%s5 + $0x8] sm:$0xff]
      %v1280 = vld [vmem:[%s5 + $0x10] sm:$0xff]
      %v1281 = vld [vmem:[%s5 + $0x18] sm:$0xff]
      %v1282 = vld [vmem:[%s5 + $0x20] sm:$0xff]
      %v1283 = vld [vmem:[%s5 + $0x28] sm:$0xff]
      %v1284 = vld [vmem:[%s5 + $0x30] sm:$0xff]
      %v1285 = vld [vmem:[%s5 + $0x38] sm:$0xff]
      %v1286 = vld [vmem:[%s5 + $0x40] sm:$0xff]
      %v1287 = vld [vmem:[%s5 + $0x48] sm:$0xff]
      %v1288 = vld [vmem:[%s5 + $0x50] sm:$0xff]
      %v1289 = vld [vmem:[%s5 + $0x58] sm:$0xff]
      %v1290 = vld [vmem:[%s5 + $0x60] sm:$0xff]
      %v1291 = vld [vmem:[%s5 + $0x68] sm:$0xff]
      %v1292 = vld [vmem:[%s5 + $0x70] sm:$0xff]
      %v1293 = vld [vmem:[%s5 + $0x78] sm:$0xff]
      %v1294 = vld [vmem:[%s6] sm:$0x1]
      %v1296 = vperm.slane %v1294, 0
      %1298 = vmatpush.msra.mxu0 %v1293
      %1299 = vmatpush.msra.mxu0 %v1292
      %1300 = vmatpush.msra.mxu0 %v1291
      %1301 = vmatpush.msra.mxu0 %v1290
      %1302 = vmatpush.msra.mxu0 %v1289
      %1303 = vmatpush.msra.mxu0 %v1288
      %1304 = vmatpush.msra.mxu0 %v1287
      %1305 = vmatpush.msra.mxu0 %v1286
      %1306 = vmatpush.msra.mxu0 %v1285
      %1307 = vmatpush.msra.mxu0 %v1284
      %1308 = vmatpush.msra.mxu0 %v1283
      %1309 = vmatpush.msra.mxu0 %v1282
      %1310 = vmatpush.msra.mxu0 %v1281
      %1311 = vmatpush.msra.mxu0 %v1280
      %1312 = vmatpush.msra.mxu0 %v1279
      %1313 = vmatpush.msra.mxu0 %v1278
      %1314 = vmatmul.f32.gmra.mxu0 %v1248
      %v1315 = vpop.f32.mrf.mxu0
      %v1316 = vadd.f32 %v1296, %v1315
      %1317 = vmatmul.f32.gmra.mxu0 %v1249
      %v1318 = vpop.f32.mrf.mxu0
      %v1319 = vadd.f32 %v1296, %v1318
      %1320 = vmatmul.f32.gmra.mxu0 %v1250
      %v1321 = vpop.f32.mrf.mxu0
      %v1322 = vadd.f32 %v1296, %v1321
      %1323 = vmatmul.f32.gmra.mxu0 %v1251
      %v1324 = vpop.f32.mrf.mxu0
      %v1325 = vadd.f32 %v1296, %v1324
      %1326 = vmatmul.f32.gmra.mxu0 %v1252
      %v1327 = vpop.f32.mrf.mxu0
      %v1328 = vadd.f32 %v1296, %v1327
      %1329 = vmatmul.f32.gmra.mxu0 %v1253
      %v1330 = vpop.f32.mrf.mxu0
      %v1331 = vadd.f32 %v1296, %v1330
      %1332 = vmatmul.f32.gmra.mxu0 %v1254
      %v1333 = vpop.f32.mrf.mxu0
      %v1334 = vadd.f32 %v1296, %v1333
      %1335 = vmatmul.f32.gmra.mxu0 %v1255
      %v1336 = vpop.f32.mrf.mxu0
      %v1337 = vadd.f32 %v1296, %v1336
      %1338 = vmatmul.f32.gmra.mxu0 %v1256
      %v1339 = vpop.f32.mrf.mxu0
      %v1340 = vadd.f32 %v1296, %v1339
      %1341 = vmatmul.f32.gmra.mxu0 %v1257
      %v1342 = vpop.f32.mrf.mxu0
      %v1343 = vadd.f32 %v1296, %v1342
      %1344 = vmatmul.f32.gmra.mxu0 %v1258
      %v1345 = vpop.f32.mrf.mxu0
      %v1346 = vadd.f32 %v1296, %v1345
      %1347 = vmatmul.f32.gmra.mxu0 %v1259
      %v1348 = vpop.f32.mrf.mxu0
      %v1349 = vadd.f32 %v1296, %v1348
      %1350 = vmatmul.f32.gmra.mxu0 %v1260
      %v1351 = vpop.f32.mrf.mxu0
      %v1352 = vadd.f32 %v1296, %v1351
      %1353 = vmatmul.f32.gmra.mxu0 %v1261
      %v1354 = vpop.f32.mrf.mxu0
      %v1355 = vadd.f32 %v1296, %v1354
      %1356 = vmatmul.f32.gmra.mxu0 %v1262
      %v1357 = vpop.f32.mrf.mxu0
      %v1358 = vadd.f32 %v1296, %v1357
      %1359 = vmatmul.f32.gmra.mxu0 %v1263
      %v1360 = vpop.f32.mrf.mxu0
      %v1361 = vadd.f32 %v1296, %v1360
      %1362 = vmatmul.f32.gmra.mxu0 %v1264
      %v1363 = vpop.f32.mrf.mxu0
      %v1364 = vadd.f32 %v1296, %v1363
      %1365 = vmatmul.f32.gmra.mxu0 %v1265
      %v1366 = vpop.f32.mrf.mxu0
      %v1367 = vadd.f32 %v1296, %v1366
      %1368 = vmatmul.f32.gmra.mxu0 %v1266
      %v1369 = vpop.f32.mrf.mxu0
      %v1370 = vadd.f32 %v1296, %v1369
      %1371 = vmatmul.f32.gmra.mxu0 %v1267
      %v1372 = vpop.f32.mrf.mxu0
      %v1373 = vadd.f32 %v1296, %v1372
      %1374 = vmatmul.f32.gmra.mxu0 %v1268
      %v1375 = vpop.f32.mrf.mxu0
      %v1376 = vadd.f32 %v1296, %v1375
      %1377 = vmatmul.f32.gmra.mxu0 %v1269
      %v1378 = vpop.f32.mrf.mxu0
      %v1379 = vadd.f32 %v1296, %v1378
      %1380 = vmatmul.f32.gmra.mxu0 %v1270
      %v1381 = vpop.f32.mrf.mxu0
      %v1382 = vadd.f32 %v1296, %v1381
      %1383 = vmatmul.f32.gmra.mxu0 %v1271
      %v1384 = vpop.f32.mrf.mxu0
      %v1385 = vadd.f32 %v1296, %v1384
      %1386 = vmatmul.f32.gmra.mxu0 %v1272
      %v1387 = vpop.f32.mrf.mxu0
      %v1388 = vadd.f32 %v1296, %v1387
      %1389 = vmatmul.f32.gmra.mxu0 %v1273
      %v1390 = vpop.f32.mrf.mxu0
      %v1391 = vadd.f32 %v1296, %v1390
      %1392 = vmatmul.f32.gmra.mxu0 %v1274
      %v1393 = vpop.f32.mrf.mxu0
      %v1394 = vadd.f32 %v1296, %v1393
      %1395 = vmatmul.f32.gmra.mxu0 %v1275
      %v1396 = vpop.f32.mrf.mxu0
      %v1397 = vadd.f32 %v1296, %v1396
      %1398 = vmatmul.f32.gmra.mxu0 %v1276
      %v1399 = vpop.f32.mrf.mxu0
      %v1400 = vadd.f32 %v1296, %v1399
      %1401 = vmatmul.f32.gmra.mxu0 %v1277
      %v1402 = vpop.f32.mrf.mxu0
      %v1403 = vadd.f32 %v1296, %v1402
      %1404 = vdwg.mxu0
      %1405 = vst.msk [vmem:[%s278] sm:$0xff] %vm316, %v1316
      %vm1406 = vcmask 63488
      %1407 = vst.msk [vmem:[%s278 + $0x8] sm:$0x7f] %vm1406, %v1319
      %1408 = vst.msk [vmem:[%s278 + $0x10] sm:$0xff] %vm316, %v1322
      %1409 = vst.msk [vmem:[%s278 + $0x18] sm:$0x7f] %vm1406, %v1325
      %1410 = vst.msk [vmem:[%s278 + $0x20] sm:$0xff] %vm316, %v1328
      %1411 = vst.msk [vmem:[%s278 + $0x28] sm:$0x7f] %vm1406, %v1331
      %1412 = vst.msk [vmem:[%s278 + $0x30] sm:$0xff] %vm316, %v1334
      %1413 = vst.msk [vmem:[%s278 + $0x38] sm:$0x7f] %vm1406, %v1337
      %1414 = vst.msk [vmem:[%s278 + $0x40] sm:$0xff] %vm316, %v1340
      %1415 = vst.msk [vmem:[%s278 + $0x48] sm:$0x7f] %vm1406, %v1343
      %1416 = vst.msk [vmem:[%s278 + $0x50] sm:$0xff] %vm316, %v1346
      %1417 = vst.msk [vmem:[%s278 + $0x58] sm:$0x7f] %vm1406, %v1349
      %1418 = vst.msk [vmem:[%s278 + $0x60] sm:$0xff] %vm316, %v1352
      %1419 = vst.msk [vmem:[%s278 + $0x68] sm:$0x7f] %vm1406, %v1355
      %1420 = vst.msk [vmem:[%s278 + $0x70] sm:$0xff] %vm316, %v1358
      %1421 = vst.msk [vmem:[%s278 + $0x78] sm:$0x7f] %vm1406, %v1361
      %1422 = vst.msk [vmem:[%s278 + $0x80] sm:$0xff] %vm316, %v1364
      %1423 = vst.msk [vmem:[%s278 + $0x88] sm:$0x7f] %vm1406, %v1367
      %1424 = vst.msk [vmem:[%s278 + $0x90] sm:$0xff] %vm316, %v1370
      %1425 = vst.msk [vmem:[%s278 + $0x98] sm:$0x7f] %vm1406, %v1373
      %1426 = vst.msk [vmem:[%s278 + $0xa0] sm:$0xff] %vm316, %v1376
      %1427 = vst.msk [vmem:[%s278 + $0xa8] sm:$0x7f] %vm1406, %v1379
      %1428 = vst.msk [vmem:[%s278 + $0xb0] sm:$0xff] %vm316, %v1382
      %1429 = vst.msk [vmem:[%s278 + $0xb8] sm:$0x7f] %vm1406, %v1385
      %1430 = vst.msk [vmem:[%s278 + $0xc0] sm:$0xff] %vm316, %v1388
      %1431 = vst.msk [vmem:[%s278 + $0xc8] sm:$0x7f] %vm1406, %v1391
      %1432 = vst.msk [vmem:[%s278 + $0xd0] sm:$0xff] %vm316, %v1394
      %1433 = vst.msk [vmem:[%s278 + $0xd8] sm:$0x7f] %vm1406, %v1397
      %1434 = vst.msk [vmem:[%s278 + $0xe0] sm:$0xff] %vm316, %v1400
      %1435 = vst.msk [vmem:[%s278 + $0xe8] sm:$0x7f] %vm1406, %v1403
      %p1436 = scmp.lt.s32.totalorder %s18, 1
      %s1437 = scalar_select %p1436, %s18, 1
      %s1438 = smul.addr %s1437, 30
      %s1439 = smul.addr %s1438, 8
      %s1440 = scalar_lea.vmem %s7, %s1439
      // Predicated region
      $region49: #{mv2block_forward.1} parent=47 // pred_check
        %p1441 = pneg %p188
      $region50: #{mv2block_forward.1} parent=47 // pred_check_branch
        %1443 = sbr.rel (%p1441) target = $region52
      $region51: #{mv2block_forward.1} parent=47 // pred_region
        _
      $region52: #{mv2block_forward.1} parent=47 // pred_fallthru
        _
    $region48: #{mv2block_forward.1} parent=5 // pred_fallthru
      _
    %p1444 = scmp.le.s32.totalorder 2, %s13
    // Predicated region
    $region53: #{mv2block_forward.1} parent=5 // pred_check
      %p1445 = pneg %p1444
    $region54: #{mv2block_forward.1} parent=5 // pred_check_branch
      %1447 = sbr.rel (%p1445) target = $region56
    $region55: #{mv2block_forward.1} parent=5 // pred_region
      %s1448 = ssub.s32 %s13, 2
      // Predicated region
      $region57: #{mv2block_forward.1} parent=55 // pred_check
        %p1449 = pneg %p194
      $region58: #{mv2block_forward.1} parent=55 // pred_check_branch
        %1451 = sbr.rel (%p1449) target = $region60
      $region59: #{mv2block_forward.1} parent=55 // pred_region
        %p1452 = scmp.lt.s32.totalorder %s19, 1
        %s1453 = scalar_select %p1452, %s19, 1
        %s1454 = smul.addr %s1453, 30
        %s1455 = smul.addr %s1454, 8
        %s1456 = scalar_lea.vmem %s7, %s1455
      $region60: #{mv2block_forward.1} parent=55 // pred_fallthru
        _
    $region56: #{mv2block_forward.1} parent=5 // pred_fallthru
      _
  $region6: #{mv2block_forward.1} parent=0 // loop_footer
    %s17 = sadd.s32 1, %s13
  $region7: #{mv2block_forward.1} parent=0 // loop_footer_branch
    %12 = sbr.rel target = $region3
  $region8: #{mv2block_forward.1} parent=0 // loop_exit
    _

</llo_original>
